<compile_context>
chip_gen: v5e
topology: v5e:2x2
jax: 0.10.0
libtpu: 0.0.40
codegen_flags: <defaults>
</compile_context>

<pallas_src>
import functools

import jax
import jax.numpy as jnp
from jax import lax
from jax.experimental import pallas as pl
from jax.experimental.pallas import tpu as pltpu


def _conv2d_view_kernel(x_ref, w_ref, o_ref, patch_ref, *, kh_size, kw_size):
    """conv2d(x, w) written as one im2col matmul, output (N, O, OH*OW).

    x_ref:     (N, C, H, W)        activations, PyTorch NCHW (consumed as-is)
    w_ref:     (O, KH*KW*C)        weights, tap-major flatten (matches concat below)
    o_ref:     (N, O, OH*OW)       conv output, flattened spatial on lanes
    patch_ref: (K, N*PPAD)         VMEM scratch: lane-dense im2col matrix,
                                   per-batch column blocks padded to PPAD lanes
    """
    N, C, H, W = x_ref.shape
    O, K = w_ref.shape
    KH, KW = kh_size, kw_size
    OH = H - KH + 1
    OW = W - KW + 1
    P = OH * OW
    PPAD = patch_ref.shape[1] // N           # 128-aligned per-batch column block

    # Zero the pad columns so uninitialized scratch never feeds the MXU with
    # NaN/Inf (those columns are never stored anyway; this is belt-and-braces).
    pad = PPAD - P
    if pad:
        zeros_pad = jnp.zeros((K, pad), dtype=patch_ref.dtype)
        for n in range(N):
            patch_ref[:, n * PPAD + P:(n + 1) * PPAD] = zeros_pad

    x = x_ref[...]

    # 9 tap slices (all C channels per slice).  Axis-1 index is
    # k = (kh*KW + kw)*C + c, matching the wrapper's (O, KH*KW*C) weight flatten.
    # Static slices + concat along an untiled (major) axis only.
    patch4d = jnp.concatenate(
        [x[:, :, kh:kh + OH, kw:kw + OW]
         for kh in range(KH) for kw in range(KW)],
        axis=1)                                              # (N, K, OH, OW)

    # Scatter rows of the im2col matrix: patch_ref[k, n*PPAD + oh*OW + ow]
    # = x[n, c, oh+kh, ow+kw].  28 static-offset (K, OW) block stores.
    for n in range(N):
        base = n * PPAD
        for oh in range(OH):
            start = base + oh * OW
            patch_ref[:, start:start + OW] = patch4d[n, :, oh, :]

    # Single im2col matmul on the MXU, f32 accumulation:
    # out[o, n*PPAD + p] = sum_k w[o, k] * patch[k, n*PPAD + p].
    out = lax.dot_general(
        w_ref[...], patch_ref[...],
        dimension_numbers=(((1,), (0,)), ((), ())),
        preferred_element_type=jnp.float32)                  # (O, N*PPAD)
    out = out.astype(o_ref.dtype)                            # cast once (no-op for f32)

    # Two aligned (O, P) block stores, one per batch element.
    for n in range(N):
        o_ref[n] = out[:, n * PPAD:n * PPAD + P]


def reshape_model_forward(inp_nchw, other_oihw):
    """Mirrors ReshapeModel.forward: conv2d(input, other).view(2, -1)."""
    N, C, H, W = inp_nchw.shape
    O, _, KH, KW = other_oihw.shape
    OH = H - KH + 1
    OW = W - KW + 1
    P = OH * OW
    K = C * KH * KW
    PPAD = pl.cdiv(P, 128) * 128          # 128-aligned per-batch column block

    # Tap-major weight flatten (O, KH*KW*C): one-time ~1 KB wrapper-side permute.
    w2d = jnp.transpose(other_oihw, (0, 2, 3, 1)).reshape(O, K)

    kernel = functools.partial(_conv2d_view_kernel, kh_size=KH, kw_size=KW)

    out3 = pl.pallas_call(
        kernel,
        out_shape=jax.ShapeDtypeStruct((N, O, P), inp_nchw.dtype),
        in_specs=[
            pl.BlockSpec(memory_space=pltpu.MemorySpace.VMEM),
            pl.BlockSpec(memory_space=pltpu.MemorySpace.VMEM),
        ],
        out_specs=pl.BlockSpec(memory_space=pltpu.MemorySpace.VMEM),
        scratch_shapes=[pltpu.VMEM((K, N * PPAD), jnp.float32)],
    )(inp_nchw, w2d)

    # .view(2, -1): free row-major regrouping of the contiguous (N, O, P) result.
    return out3.reshape(2, -1)


if __name__ == "__main__":
    key = jax.random.PRNGKey(0)
    k1, k2 = jax.random.split(key)

    inp = jax.random.normal(k1, (2, 4, 16, 16), dtype=jnp.float32)    # NCHW
    other = jax.random.normal(k2, (8, 4, 3, 3), dtype=jnp.float32)    # OIHW

    out = reshape_model_forward(inp, other)
    out = jax.block_until_ready(out)

    # Reference: XLA conv (same semantics as F.conv2d, valid padding) + view.
    ref = lax.conv_general_dilated(
        inp, other, window_strides=(1, 1), padding="VALID",
        dimension_numbers=("NCHW", "OIHW", "NCHW")).reshape(2, -1)

    assert out.shape == (2, 8 * 14 * 14), out.shape
    assert jnp.allclose(out, ref, atol=1e-4, rtol=1e-4), float(
        jnp.max(jnp.abs(out - ref)))

    print("KERNEL_OK")
</pallas_src>

<mosaic_0001>
module attributes {stable_mosaic.version = 11 : i64} {
  func.func @_conv2d_view_kernel(%arg0: memref<2x4x16x16xf32, #tpu.memory_space<vmem>>, %arg1: memref<8x36xf32, #tpu.memory_space<vmem>>, %arg2: memref<2x8x196xf32, #tpu.memory_space<vmem>>, %arg3: memref<36x512xf32, #tpu.memory_space<vmem>>) attributes {dimension_semantics = [], scalar_prefetch = 0 : i64, scratch_operands = 1 : i64, tpu.core_type = #tpu.core_type<tc>} {
    %cst = arith.constant 0.000000e+00 : f32
    %0 = vector.broadcast %cst : f32 to vector<36x60xf32>
    %c0 = arith.constant 0 : index
    %c196 = arith.constant 196 : index
    %1 = vector.load %arg3[%c0, %c196] : memref<36x512xf32, #tpu.memory_space<vmem>>, vector<36x60xf32>
    tpu.vector_store %arg3[%c0, %c196], %0 {strides = array<i32>} : memref<36x512xf32, #tpu.memory_space<vmem>>, vector<36x60xf32>,
    %c0_0 = arith.constant 0 : index
    %c452 = arith.constant 452 : index
    %2 = vector.load %arg3[%c0_0, %c452] : memref<36x512xf32, #tpu.memory_space<vmem>>, vector<36x60xf32>
    tpu.vector_store %arg3[%c0_0, %c452], %0 {strides = array<i32>} : memref<36x512xf32, #tpu.memory_space<vmem>>, vector<36x60xf32>,
    %c0_1 = arith.constant 0 : index
    %c0_2 = arith.constant 0 : index
    %c0_3 = arith.constant 0 : index
    %c0_4 = arith.constant 0 : index
    %3 = vector.load %arg0[%c0_1, %c0_2, %c0_3, %c0_4] : memref<2x4x16x16xf32, #tpu.memory_space<vmem>>, vector<2x4x16x16xf32>
    %4 = vector.extract_strided_slice %3 {offsets = [0, 0, 0, 0], sizes = [2, 4, 14, 14], strides = [1, 1, 1, 1]} : vector<2x4x16x16xf32> to vector<2x4x14x14xf32>
    %5 = vector.extract_strided_slice %3 {offsets = [0, 0, 0, 1], sizes = [2, 4, 14, 14], strides = [1, 1, 1, 1]} : vector<2x4x16x16xf32> to vector<2x4x14x14xf32>
    %6 = vector.extract_strided_slice %3 {offsets = [0, 0, 0, 2], sizes = [2, 4, 14, 14], strides = [1, 1, 1, 1]} : vector<2x4x16x16xf32> to vector<2x4x14x14xf32>
    %7 = vector.extract_strided_slice %3 {offsets = [0, 0, 1, 0], sizes = [2, 4, 14, 14], strides = [1, 1, 1, 1]} : vector<2x4x16x16xf32> to vector<2x4x14x14xf32>
    %8 = vector.extract_strided_slice %3 {offsets = [0, 0, 1, 1], sizes = [2, 4, 14, 14], strides = [1, 1, 1, 1]} : vector<2x4x16x16xf32> to vector<2x4x14x14xf32>
    %9 = vector.extract_strided_slice %3 {offsets = [0, 0, 1, 2], sizes = [2, 4, 14, 14], strides = [1, 1, 1, 1]} : vector<2x4x16x16xf32> to vector<2x4x14x14xf32>
    %10 = vector.extract_strided_slice %3 {offsets = [0, 0, 2, 0], sizes = [2, 4, 14, 14], strides = [1, 1, 1, 1]} : vector<2x4x16x16xf32> to vector<2x4x14x14xf32>
    %11 = vector.extract_strided_slice %3 {offsets = [0, 0, 2, 1], sizes = [2, 4, 14, 14], strides = [1, 1, 1, 1]} : vector<2x4x16x16xf32> to vector<2x4x14x14xf32>
    %12 = vector.extract_strided_slice %3 {offsets = [0, 0, 2, 2], sizes = [2, 4, 14, 14], strides = [1, 1, 1, 1]} : vector<2x4x16x16xf32> to vector<2x4x14x14xf32>
    %13 = tpu.concatenate %4, %5, %6, %7, %8, %9, %10, %11, %12 in 1 : vector<2x4x14x14xf32>, vector<2x4x14x14xf32>, vector<2x4x14x14xf32>, vector<2x4x14x14xf32>, vector<2x4x14x14xf32>, vector<2x4x14x14xf32>, vector<2x4x14x14xf32>, vector<2x4x14x14xf32>, vector<2x4x14x14xf32> -> vector<2x36x14x14xf32>
    %14 = vector.extract_strided_slice %13 {offsets = [0, 0, 0, 0], sizes = [1, 36, 1, 14], strides = [1, 1, 1, 1]} : vector<2x36x14x14xf32> to vector<1x36x1x14xf32>
    %15 = vector.shape_cast %14 : vector<1x36x1x14xf32> to vector<36x14xf32>
    %c0_5 = arith.constant 0 : index
    %c0_6 = arith.constant 0 : index
    %16 = vector.load %arg3[%c0_5, %c0_6] : memref<36x512xf32, #tpu.memory_space<vmem>>, vector<36x14xf32>
    tpu.vector_store %arg3[%c0_5, %c0_6], %15 {strides = array<i32>} : memref<36x512xf32, #tpu.memory_space<vmem>>, vector<36x14xf32>,
    %17 = vector.extract_strided_slice %13 {offsets = [0, 0, 1, 0], sizes = [1, 36, 1, 14], strides = [1, 1, 1, 1]} : vector<2x36x14x14xf32> to vector<1x36x1x14xf32>
    %18 = vector.shape_cast %17 : vector<1x36x1x14xf32> to vector<36x14xf32>
    %c0_7 = arith.constant 0 : index
    %c14 = arith.constant 14 : index
    %19 = vector.load %arg3[%c0_7, %c14] : memref<36x512xf32, #tpu.memory_space<vmem>>, vector<36x14xf32>
    tpu.vector_store %arg3[%c0_7, %c14], %18 {strides = array<i32>} : memref<36x512xf32, #tpu.memory_space<vmem>>, vector<36x14xf32>,
    %20 = vector.extract_strided_slice %13 {offsets = [0, 0, 2, 0], sizes = [1, 36, 1, 14], strides = [1, 1, 1, 1]} : vector<2x36x14x14xf32> to vector<1x36x1x14xf32>
    %21 = vector.shape_cast %20 : vector<1x36x1x14xf32> to vector<36x14xf32>
    %c0_8 = arith.constant 0 : index
    %c28 = arith.constant 28 : index
    %22 = vector.load %arg3[%c0_8, %c28] : memref<36x512xf32, #tpu.memory_space<vmem>>, vector<36x14xf32>
    tpu.vector_store %arg3[%c0_8, %c28], %21 {strides = array<i32>} : memref<36x512xf32, #tpu.memory_space<vmem>>, vector<36x14xf32>,
    %23 = vector.extract_strided_slice %13 {offsets = [0, 0, 3, 0], sizes = [1, 36, 1, 14], strides = [1, 1, 1, 1]} : vector<2x36x14x14xf32> to vector<1x36x1x14xf32>
    %24 = vector.shape_cast %23 : vector<1x36x1x14xf32> to vector<36x14xf32>
    %c0_9 = arith.constant 0 : index
    %c42 = arith.constant 42 : index
    %25 = vector.load %arg3[%c0_9, %c42] : memref<36x512xf32, #tpu.memory_space<vmem>>, vector<36x14xf32>
    tpu.vector_store %arg3[%c0_9, %c42], %24 {strides = array<i32>} : memref<36x512xf32, #tpu.memory_space<vmem>>, vector<36x14xf32>,
    %26 = vector.extract_strided_slice %13 {offsets = [0, 0, 4, 0], sizes = [1, 36, 1, 14], strides = [1, 1, 1, 1]} : vector<2x36x14x14xf32> to vector<1x36x1x14xf32>
    %27 = vector.shape_cast %26 : vector<1x36x1x14xf32> to vector<36x14xf32>
    %c0_10 = arith.constant 0 : index
    %c56 = arith.constant 56 : index
    %28 = vector.load %arg3[%c0_10, %c56] : memref<36x512xf32, #tpu.memory_space<vmem>>, vector<36x14xf32>
    tpu.vector_store %arg3[%c0_10, %c56], %27 {strides = array<i32>} : memref<36x512xf32, #tpu.memory_space<vmem>>, vector<36x14xf32>,
    %29 = vector.extract_strided_slice %13 {offsets = [0, 0, 5, 0], sizes = [1, 36, 1, 14], strides = [1, 1, 1, 1]} : vector<2x36x14x14xf32> to vector<1x36x1x14xf32>
    %30 = vector.shape_cast %29 : vector<1x36x1x14xf32> to vector<36x14xf32>
    %c0_11 = arith.constant 0 : index
    %c70 = arith.constant 70 : index
    %31 = vector.load %arg3[%c0_11, %c70] : memref<36x512xf32, #tpu.memory_space<vmem>>, vector<36x14xf32>
    tpu.vector_store %arg3[%c0_11, %c70], %30 {strides = array<i32>} : memref<36x512xf32, #tpu.memory_space<vmem>>, vector<36x14xf32>,
    %32 = vector.extract_strided_slice %13 {offsets = [0, 0, 6, 0], sizes = [1, 36, 1, 14], strides = [1, 1, 1, 1]} : vector<2x36x14x14xf32> to vector<1x36x1x14xf32>
    %33 = vector.shape_cast %32 : vector<1x36x1x14xf32> to vector<36x14xf32>
    %c0_12 = arith.constant 0 : index
    %c84 = arith.constant 84 : index
    %34 = vector.load %arg3[%c0_12, %c84] : memref<36x512xf32, #tpu.memory_space<vmem>>, vector<36x14xf32>
    tpu.vector_store %arg3[%c0_12, %c84], %33 {strides = array<i32>} : memref<36x512xf32, #tpu.memory_space<vmem>>, vector<36x14xf32>,
    %35 = vector.extract_strided_slice %13 {offsets = [0, 0, 7, 0], sizes = [1, 36, 1, 14], strides = [1, 1, 1, 1]} : vector<2x36x14x14xf32> to vector<1x36x1x14xf32>
    %36 = vector.shape_cast %35 : vector<1x36x1x14xf32> to vector<36x14xf32>
    %c0_13 = arith.constant 0 : index
    %c98 = arith.constant 98 : index
    %37 = vector.load %arg3[%c0_13, %c98] : memref<36x512xf32, #tpu.memory_space<vmem>>, vector<36x14xf32>
    tpu.vector_store %arg3[%c0_13, %c98], %36 {strides = array<i32>} : memref<36x512xf32, #tpu.memory_space<vmem>>, vector<36x14xf32>,
    %38 = vector.extract_strided_slice %13 {offsets = [0, 0, 8, 0], sizes = [1, 36, 1, 14], strides = [1, 1, 1, 1]} : vector<2x36x14x14xf32> to vector<1x36x1x14xf32>
    %39 = vector.shape_cast %38 : vector<1x36x1x14xf32> to vector<36x14xf32>
    %c0_14 = arith.constant 0 : index
    %c112 = arith.constant 112 : index
    %40 = vector.load %arg3[%c0_14, %c112] : memref<36x512xf32, #tpu.memory_space<vmem>>, vector<36x14xf32>
    tpu.vector_store %arg3[%c0_14, %c112], %39 {strides = array<i32>} : memref<36x512xf32, #tpu.memory_space<vmem>>, vector<36x14xf32>,
    %41 = vector.extract_strided_slice %13 {offsets = [0, 0, 9, 0], sizes = [1, 36, 1, 14], strides = [1, 1, 1, 1]} : vector<2x36x14x14xf32> to vector<1x36x1x14xf32>
    %42 = vector.shape_cast %41 : vector<1x36x1x14xf32> to vector<36x14xf32>
    %c0_15 = arith.constant 0 : index
    %c126 = arith.constant 126 : index
    %43 = vector.load %arg3[%c0_15, %c126] : memref<36x512xf32, #tpu.memory_space<vmem>>, vector<36x14xf32>
    tpu.vector_store %arg3[%c0_15, %c126], %42 {strides = array<i32>} : memref<36x512xf32, #tpu.memory_space<vmem>>, vector<36x14xf32>,
    %44 = vector.extract_strided_slice %13 {offsets = [0, 0, 10, 0], sizes = [1, 36, 1, 14], strides = [1, 1, 1, 1]} : vector<2x36x14x14xf32> to vector<1x36x1x14xf32>
    %45 = vector.shape_cast %44 : vector<1x36x1x14xf32> to vector<36x14xf32>
    %c0_16 = arith.constant 0 : index
    %c140 = arith.constant 140 : index
    %46 = vector.load %arg3[%c0_16, %c140] : memref<36x512xf32, #tpu.memory_space<vmem>>, vector<36x14xf32>
    tpu.vector_store %arg3[%c0_16, %c140], %45 {strides = array<i32>} : memref<36x512xf32, #tpu.memory_space<vmem>>, vector<36x14xf32>,
    %47 = vector.extract_strided_slice %13 {offsets = [0, 0, 11, 0], sizes = [1, 36, 1, 14], strides = [1, 1, 1, 1]} : vector<2x36x14x14xf32> to vector<1x36x1x14xf32>
    %48 = vector.shape_cast %47 : vector<1x36x1x14xf32> to vector<36x14xf32>
    %c0_17 = arith.constant 0 : index
    %c154 = arith.constant 154 : index
    %49 = vector.load %arg3[%c0_17, %c154] : memref<36x512xf32, #tpu.memory_space<vmem>>, vector<36x14xf32>
    tpu.vector_store %arg3[%c0_17, %c154], %48 {strides = array<i32>} : memref<36x512xf32, #tpu.memory_space<vmem>>, vector<36x14xf32>,
    %50 = vector.extract_strided_slice %13 {offsets = [0, 0, 12, 0], sizes = [1, 36, 1, 14], strides = [1, 1, 1, 1]} : vector<2x36x14x14xf32> to vector<1x36x1x14xf32>
    %51 = vector.shape_cast %50 : vector<1x36x1x14xf32> to vector<36x14xf32>
    %c0_18 = arith.constant 0 : index
    %c168 = arith.constant 168 : index
    %52 = vector.load %arg3[%c0_18, %c168] : memref<36x512xf32, #tpu.memory_space<vmem>>, vector<36x14xf32>
    tpu.vector_store %arg3[%c0_18, %c168], %51 {strides = array<i32>} : memref<36x512xf32, #tpu.memory_space<vmem>>, vector<36x14xf32>,
    %53 = vector.extract_strided_slice %13 {offsets = [0, 0, 13, 0], sizes = [1, 36, 1, 14], strides = [1, 1, 1, 1]} : vector<2x36x14x14xf32> to vector<1x36x1x14xf32>
    %54 = vector.shape_cast %53 : vector<1x36x1x14xf32> to vector<36x14xf32>
    %c0_19 = arith.constant 0 : index
    %c182 = arith.constant 182 : index
    %55 = vector.load %arg3[%c0_19, %c182] : memref<36x512xf32, #tpu.memory_space<vmem>>, vector<36x14xf32>
    tpu.vector_store %arg3[%c0_19, %c182], %54 {strides = array<i32>} : memref<36x512xf32, #tpu.memory_space<vmem>>, vector<36x14xf32>,
    %56 = vector.extract_strided_slice %13 {offsets = [1, 0, 0, 0], sizes = [1, 36, 1, 14], strides = [1, 1, 1, 1]} : vector<2x36x14x14xf32> to vector<1x36x1x14xf32>
    %57 = vector.shape_cast %56 : vector<1x36x1x14xf32> to vector<36x14xf32>
    %c0_20 = arith.constant 0 : index
    %c256 = arith.constant 256 : index
    %58 = vector.load %arg3[%c0_20, %c256] : memref<36x512xf32, #tpu.memory_space<vmem>>, vector<36x14xf32>
    tpu.vector_store %arg3[%c0_20, %c256], %57 {strides = array<i32>} : memref<36x512xf32, #tpu.memory_space<vmem>>, vector<36x14xf32>,
    %59 = vector.extract_strided_slice %13 {offsets = [1, 0, 1, 0], sizes = [1, 36, 1, 14], strides = [1, 1, 1, 1]} : vector<2x36x14x14xf32> to vector<1x36x1x14xf32>
    %60 = vector.shape_cast %59 : vector<1x36x1x14xf32> to vector<36x14xf32>
    %c0_21 = arith.constant 0 : index
    %c270 = arith.constant 270 : index
    %61 = vector.load %arg3[%c0_21, %c270] : memref<36x512xf32, #tpu.memory_space<vmem>>, vector<36x14xf32>
    tpu.vector_store %arg3[%c0_21, %c270], %60 {strides = array<i32>} : memref<36x512xf32, #tpu.memory_space<vmem>>, vector<36x14xf32>,
    %62 = vector.extract_strided_slice %13 {offsets = [1, 0, 2, 0], sizes = [1, 36, 1, 14], strides = [1, 1, 1, 1]} : vector<2x36x14x14xf32> to vector<1x36x1x14xf32>
    %63 = vector.shape_cast %62 : vector<1x36x1x14xf32> to vector<36x14xf32>
    %c0_22 = arith.constant 0 : index
    %c284 = arith.constant 284 : index
    %64 = vector.load %arg3[%c0_22, %c284] : memref<36x512xf32, #tpu.memory_space<vmem>>, vector<36x14xf32>
    tpu.vector_store %arg3[%c0_22, %c284], %63 {strides = array<i32>} : memref<36x512xf32, #tpu.memory_space<vmem>>, vector<36x14xf32>,
    %65 = vector.extract_strided_slice %13 {offsets = [1, 0, 3, 0], sizes = [1, 36, 1, 14], strides = [1, 1, 1, 1]} : vector<2x36x14x14xf32> to vector<1x36x1x14xf32>
    %66 = vector.shape_cast %65 : vector<1x36x1x14xf32> to vector<36x14xf32>
    %c0_23 = arith.constant 0 : index
    %c298 = arith.constant 298 : index
    %67 = vector.load %arg3[%c0_23, %c298] : memref<36x512xf32, #tpu.memory_space<vmem>>, vector<36x14xf32>
    tpu.vector_store %arg3[%c0_23, %c298], %66 {strides = array<i32>} : memref<36x512xf32, #tpu.memory_space<vmem>>, vector<36x14xf32>,
    %68 = vector.extract_strided_slice %13 {offsets = [1, 0, 4, 0], sizes = [1, 36, 1, 14], strides = [1, 1, 1, 1]} : vector<2x36x14x14xf32> to vector<1x36x1x14xf32>
    %69 = vector.shape_cast %68 : vector<1x36x1x14xf32> to vector<36x14xf32>
    %c0_24 = arith.constant 0 : index
    %c312 = arith.constant 312 : index
    %70 = vector.load %arg3[%c0_24, %c312] : memref<36x512xf32, #tpu.memory_space<vmem>>, vector<36x14xf32>
    tpu.vector_store %arg3[%c0_24, %c312], %69 {strides = array<i32>} : memref<36x512xf32, #tpu.memory_space<vmem>>, vector<36x14xf32>,
    %71 = vector.extract_strided_slice %13 {offsets = [1, 0, 5, 0], sizes = [1, 36, 1, 14], strides = [1, 1, 1, 1]} : vector<2x36x14x14xf32> to vector<1x36x1x14xf32>
    %72 = vector.shape_cast %71 : vector<1x36x1x14xf32> to vector<36x14xf32>
    %c0_25 = arith.constant 0 : index
    %c326 = arith.constant 326 : index
    %73 = vector.load %arg3[%c0_25, %c326] : memref<36x512xf32, #tpu.memory_space<vmem>>, vector<36x14xf32>
    tpu.vector_store %arg3[%c0_25, %c326], %72 {strides = array<i32>} : memref<36x512xf32, #tpu.memory_space<vmem>>, vector<36x14xf32>,
    %74 = vector.extract_strided_slice %13 {offsets = [1, 0, 6, 0], sizes = [1, 36, 1, 14], strides = [1, 1, 1, 1]} : vector<2x36x14x14xf32> to vector<1x36x1x14xf32>
    %75 = vector.shape_cast %74 : vector<1x36x1x14xf32> to vector<36x14xf32>
    %c0_26 = arith.constant 0 : index
    %c340 = arith.constant 340 : index
    %76 = vector.load %arg3[%c0_26, %c340] : memref<36x512xf32, #tpu.memory_space<vmem>>, vector<36x14xf32>
    tpu.vector_store %arg3[%c0_26, %c340], %75 {strides = array<i32>} : memref<36x512xf32, #tpu.memory_space<vmem>>, vector<36x14xf32>,
    %77 = vector.extract_strided_slice %13 {offsets = [1, 0, 7, 0], sizes = [1, 36, 1, 14], strides = [1, 1, 1, 1]} : vector<2x36x14x14xf32> to vector<1x36x1x14xf32>
    %78 = vector.shape_cast %77 : vector<1x36x1x14xf32> to vector<36x14xf32>
    %c0_27 = arith.constant 0 : index
    %c354 = arith.constant 354 : index
    %79 = vector.load %arg3[%c0_27, %c354] : memref<36x512xf32, #tpu.memory_space<vmem>>, vector<36x14xf32>
    tpu.vector_store %arg3[%c0_27, %c354], %78 {strides = array<i32>} : memref<36x512xf32, #tpu.memory_space<vmem>>, vector<36x14xf32>,
    %80 = vector.extract_strided_slice %13 {offsets = [1, 0, 8, 0], sizes = [1, 36, 1, 14], strides = [1, 1, 1, 1]} : vector<2x36x14x14xf32> to vector<1x36x1x14xf32>
    %81 = vector.shape_cast %80 : vector<1x36x1x14xf32> to vector<36x14xf32>
    %c0_28 = arith.constant 0 : index
    %c368 = arith.constant 368 : index
    %82 = vector.load %arg3[%c0_28, %c368] : memref<36x512xf32, #tpu.memory_space<vmem>>, vector<36x14xf32>
    tpu.vector_store %arg3[%c0_28, %c368], %81 {strides = array<i32>} : memref<36x512xf32, #tpu.memory_space<vmem>>, vector<36x14xf32>,
    %83 = vector.extract_strided_slice %13 {offsets = [1, 0, 9, 0], sizes = [1, 36, 1, 14], strides = [1, 1, 1, 1]} : vector<2x36x14x14xf32> to vector<1x36x1x14xf32>
    %84 = vector.shape_cast %83 : vector<1x36x1x14xf32> to vector<36x14xf32>
    %c0_29 = arith.constant 0 : index
    %c382 = arith.constant 382 : index
    %85 = vector.load %arg3[%c0_29, %c382] : memref<36x512xf32, #tpu.memory_space<vmem>>, vector<36x14xf32>
    tpu.vector_store %arg3[%c0_29, %c382], %84 {strides = array<i32>} : memref<36x512xf32, #tpu.memory_space<vmem>>, vector<36x14xf32>,
    %86 = vector.extract_strided_slice %13 {offsets = [1, 0, 10, 0], sizes = [1, 36, 1, 14], strides = [1, 1, 1, 1]} : vector<2x36x14x14xf32> to vector<1x36x1x14xf32>
    %87 = vector.shape_cast %86 : vector<1x36x1x14xf32> to vector<36x14xf32>
    %c0_30 = arith.constant 0 : index
    %c396 = arith.constant 396 : index
    %88 = vector.load %arg3[%c0_30, %c396] : memref<36x512xf32, #tpu.memory_space<vmem>>, vector<36x14xf32>
    tpu.vector_store %arg3[%c0_30, %c396], %87 {strides = array<i32>} : memref<36x512xf32, #tpu.memory_space<vmem>>, vector<36x14xf32>,
    %89 = vector.extract_strided_slice %13 {offsets = [1, 0, 11, 0], sizes = [1, 36, 1, 14], strides = [1, 1, 1, 1]} : vector<2x36x14x14xf32> to vector<1x36x1x14xf32>
    %90 = vector.shape_cast %89 : vector<1x36x1x14xf32> to vector<36x14xf32>
    %c0_31 = arith.constant 0 : index
    %c410 = arith.constant 410 : index
    %91 = vector.load %arg3[%c0_31, %c410] : memref<36x512xf32, #tpu.memory_space<vmem>>, vector<36x14xf32>
    tpu.vector_store %arg3[%c0_31, %c410], %90 {strides = array<i32>} : memref<36x512xf32, #tpu.memory_space<vmem>>, vector<36x14xf32>,
    %92 = vector.extract_strided_slice %13 {offsets = [1, 0, 12, 0], sizes = [1, 36, 1, 14], strides = [1, 1, 1, 1]} : vector<2x36x14x14xf32> to vector<1x36x1x14xf32>
    %93 = vector.shape_cast %92 : vector<1x36x1x14xf32> to vector<36x14xf32>
    %c0_32 = arith.constant 0 : index
    %c424 = arith.constant 424 : index
    %94 = vector.load %arg3[%c0_32, %c424] : memref<36x512xf32, #tpu.memory_space<vmem>>, vector<36x14xf32>
    tpu.vector_store %arg3[%c0_32, %c424], %93 {strides = array<i32>} : memref<36x512xf32, #tpu.memory_space<vmem>>, vector<36x14xf32>,
    %95 = vector.extract_strided_slice %13 {offsets = [1, 0, 13, 0], sizes = [1, 36, 1, 14], strides = [1, 1, 1, 1]} : vector<2x36x14x14xf32> to vector<1x36x1x14xf32>
    %96 = vector.shape_cast %95 : vector<1x36x1x14xf32> to vector<36x14xf32>
    %c0_33 = arith.constant 0 : index
    %c438 = arith.constant 438 : index
    %97 = vector.load %arg3[%c0_33, %c438] : memref<36x512xf32, #tpu.memory_space<vmem>>, vector<36x14xf32>
    tpu.vector_store %arg3[%c0_33, %c438], %96 {strides = array<i32>} : memref<36x512xf32, #tpu.memory_space<vmem>>, vector<36x14xf32>,
    %c0_34 = arith.constant 0 : index
    %c0_35 = arith.constant 0 : index
    %98 = vector.load %arg1[%c0_34, %c0_35] : memref<8x36xf32, #tpu.memory_space<vmem>>, vector<8x36xf32>
    %c0_36 = arith.constant 0 : index
    %c0_37 = arith.constant 0 : index
    %99 = vector.load %arg3[%c0_36, %c0_37] : memref<36x512xf32, #tpu.memory_space<vmem>>, vector<36x512xf32>
    %cst_38 = arith.constant dense<0.000000e+00> : vector<8x512xf32>
    %100 = tpu.matmul %98, %99, %cst_38 {dimension_numbers = #tpu.dot_dimension_numbers<[1], [0], [0], [1], [0, 0, 1, 1], [], []>} : vector<8x36xf32>, vector<36x512xf32>, vector<8x512xf32> -> vector<8x512xf32>
    %101 = vector.extract_strided_slice %100 {offsets = [0, 0], sizes = [8, 196], strides = [1, 1]} : vector<8x512xf32> to vector<8x196xf32>
    %c0_39 = arith.constant 0 : index
    %c0_40 = arith.constant 0 : index
    %c0_41 = arith.constant 0 : index
    %102 = vector.load %arg2[%c0_39, %c0_40, %c0_41] : memref<2x8x196xf32, #tpu.memory_space<vmem>>, vector<1x8x196xf32>
    %103 = vector.shape_cast %102 : vector<1x8x196xf32> to vector<8x196xf32>
    %104 = vector.shape_cast %101 : vector<8x196xf32> to vector<1x8x196xf32>
    tpu.vector_store %arg2[%c0_39, %c0_40, %c0_41], %104 {strides = array<i32>} : memref<2x8x196xf32, #tpu.memory_space<vmem>>, vector<1x8x196xf32>,
    %105 = vector.extract_strided_slice %100 {offsets = [0, 256], sizes = [8, 196], strides = [1, 1]} : vector<8x512xf32> to vector<8x196xf32>
    %c1 = arith.constant 1 : index
    %c0_42 = arith.constant 0 : index
    %c0_43 = arith.constant 0 : index
    %106 = vector.load %arg2[%c1, %c0_42, %c0_43] : memref<2x8x196xf32, #tpu.memory_space<vmem>>, vector<1x8x196xf32>
    %107 = vector.shape_cast %106 : vector<1x8x196xf32> to vector<8x196xf32>
    %108 = vector.shape_cast %105 : vector<8x196xf32> to vector<1x8x196xf32>
    tpu.vector_store %arg2[%c1, %c0_42, %c0_43], %108 {strides = array<i32>} : memref<2x8x196xf32, #tpu.memory_space<vmem>>, vector<1x8x196xf32>,
    return
  }
}

</mosaic_0001>

<llo_original>
// kernel: tpu_custom_call.1
$region0: #{tpu_custom_call.1}
  #allocation0 [shape = 'u32[]', space=smem, size = 0x4, offset = 0x4, fixed_abs, tag = 'smem constant byte address 0x4 - core index']
  #allocation1 [shape = 'u32[72,128]{1,0:T(1,128)}', space=vmem, size = 0x9000, scoped, tag = 'internal scratch']
  #allocation2 [shape = 'f32[36,512]{1,0:T(8,128)}', space=vmem, size = 0x14000, scoped, tag = 'scratch operand']
  %s0 = inlined_call_operand.hbm [shape: f32[2,4,16,16], index: 0, kind: input, shape index: {}]
  %s1 = inlined_call_operand.hbm [shape: f32[8,36], index: 1, kind: input, shape index: {}]
  %s2 = inlined_call_operand.hbm [shape: f32[2,8,196], index: 2, kind: output, shape index: {}]
  %s3 = sld [smem:[#allocation0]]
  $region26: #{tpu_custom_call.1} parent=0
    _
  %s5 = ssub.s32 1, %s3
  %s6 = scalar_select 0, %s5, %s3
  $region1: #{tpu_custom_call.1} parent=0
    #allocation3 [shape = 'u8[65536]{0}', space=vmem, size = 0x10000, scoped, tag = 'input window, operand 0, single buffered']
    #allocation4 [shape = 's32[1]{0}', space=sflag, size = 0x4, scoped, tag = 'scoped memory for tpu_custom_call.1']
    #allocation5 [shape = 's32[1]{0}', space=sflag, size = 0x4, scoped, tag = 'scoped memory for tpu_custom_call.1']
    #allocation6 [shape = 'u8[4096]{0}', space=vmem, size = 0x1000, scoped, tag = 'input window, operand 1, single buffered']
    #allocation7 [shape = 's32[1]{0}', space=sflag, size = 0x4, scoped, tag = 'scoped memory for tpu_custom_call.1']
    #allocation8 [shape = 'u8[16384]{0}', space=vmem, size = 0x4000, scoped, tag = 'output window, operand 0, single buffered']
    %7 = vsyncpa [#allocation4], 0
    %8 = vsyncpa [#allocation7], 0
    %9 = vsyncpa [#allocation5], 0
    // Predicated region
    $region2: #{tpu_custom_call.1} parent=1 // pred_check
      _
    $region3: #{tpu_custom_call.1} parent=1 // pred_check_branch
      %11 = sbr.rel (0) target = $region5
    $region4: #{tpu_custom_call.1} parent=1 // pred_region
      %13 = vsyncadd [#allocation4], 0
      %s14 = sshll.u32 %s0, 4
      %s15 = int_to_ptr.hbm [resolvable:$true] %s14
      %s16 = sshll.u32 [#allocation3], 4
      %s17 = int_to_ptr.vmem [resolvable:$true] %s16
      %22 = dma.hbm_to_vmem [thread:$0]  %s15, 2048, %s17, [#allocation4], 128, 128, 8
    $region5: #{tpu_custom_call.1} parent=1 // pred_fallthru
      _
    // Predicated region
    $region6: #{tpu_custom_call.1} parent=1 // pred_check
      _
    $region7: #{tpu_custom_call.1} parent=1 // pred_check_branch
      %24 = sbr.rel (0) target = $region9
    $region8: #{tpu_custom_call.1} parent=1 // pred_region
      %26 = vsyncadd [#allocation7], 0
      %s28 = sshll.u32 %s1, 4
      %s29 = int_to_ptr.hbm [resolvable:$true] %s28
      %s30 = sshll.u32 [#allocation6], 4
      %s31 = int_to_ptr.vmem [resolvable:$true] %s30
      %33 = dma.hbm_to_vmem [thread:$0]  %s29, 128, %s31, [#allocation7]
    $region9: #{tpu_custom_call.1} parent=1 // pred_fallthru
      _
    // Predicated region
    $region10: #{tpu_custom_call.1} parent=1 // pred_check
      _
    $region11: #{tpu_custom_call.1} parent=1 // pred_check_branch
      %35 = sbr.rel (0) target = $region13
    $region12: #{tpu_custom_call.1} parent=1 // pred_region
      %37 = dma.done [#allocation4], 2048
    $region13: #{tpu_custom_call.1} parent=1 // pred_fallthru
      _
    // Predicated region
    $region14: #{tpu_custom_call.1} parent=1 // pred_check
      _
    $region15: #{tpu_custom_call.1} parent=1 // pred_check_branch
      %39 = sbr.rel (0) target = $region17
    $region16: #{tpu_custom_call.1} parent=1 // pred_region
      %41 = dma.done [#allocation7], 128
    $region17: #{tpu_custom_call.1} parent=1 // pred_fallthru
      _
    %vm42 = vcmask 1048096
    %43 = vst.msk [vmem:[#allocation2 + $0x8] sm:$0xff] %vm42, 0.0
    %44 = vst.msk [vmem:[#allocation2 + $0x28] sm:$0xff] %vm42, 0.0
    %45 = vst.msk [vmem:[#allocation2 + $0x48] sm:$0xff] %vm42, 0.0
    %46 = vst.msk [vmem:[#allocation2 + $0x68] sm:$0xff] %vm42, 0.0
    %vm47 = vcmask 1044000
    %48 = vst.msk [vmem:[#allocation2 + $0x88] sm:$0xf] %vm47, 0.0
    %49 = vst.msk [vmem:[#allocation2 + $0x18] sm:$0xff] %vm42, 0.0
    %50 = vst.msk [vmem:[#allocation2 + $0x38] sm:$0xff] %vm42, 0.0
    %51 = vst.msk [vmem:[#allocation2 + $0x58] sm:$0xff] %vm42, 0.0
    %52 = vst.msk [vmem:[#allocation2 + $0x78] sm:$0xff] %vm42, 0.0
    %53 = vst.msk [vmem:[#allocation2 + $0x98] sm:$0xf] %vm47, 0.0
    %v54 = vld [vmem:[#allocation3] sm:$0xff]
    %v55 = vld [vmem:[#allocation3 + $0x8] sm:$0xff]
    %v56 = vld [vmem:[#allocation3 + $0x10] sm:$0xff]
    %v57 = vld [vmem:[#allocation3 + $0x18] sm:$0xff]
    %v58 = vld [vmem:[#allocation3 + $0x20] sm:$0xff]
    %v59 = vld [vmem:[#allocation3 + $0x28] sm:$0xff]
    %v60 = vld [vmem:[#allocation3 + $0x30] sm:$0xff]
    %v61 = vld [vmem:[#allocation3 + $0x38] sm:$0xff]
    %v62 = vld [vmem:[#allocation3 + $0x40] sm:$0xff]
    %v63 = vld [vmem:[#allocation3 + $0x48] sm:$0xff]
    %v64 = vld [vmem:[#allocation3 + $0x50] sm:$0xff]
    %v65 = vld [vmem:[#allocation3 + $0x58] sm:$0xff]
    %v66 = vld [vmem:[#allocation3 + $0x60] sm:$0xff]
    %v67 = vld [vmem:[#allocation3 + $0x68] sm:$0xff]
    %v68 = vld [vmem:[#allocation3 + $0x70] sm:$0xff]
    %v69 = vld [vmem:[#allocation3 + $0x78] sm:$0xff]
    %86 = vrot.lane.b32.xlu0 %v54, 127
    %v87 = vpop.permute.xlu0 %86
    %88 = vrot.lane.b32.xlu0 %v55, 127
    %v89 = vpop.permute.xlu0 %88
    %90 = vrot.lane.b32.xlu0 %v56, 127
    %v91 = vpop.permute.xlu0 %90
    %92 = vrot.lane.b32.xlu0 %v57, 127
    %v93 = vpop.permute.xlu0 %92
    %94 = vrot.lane.b32.xlu0 %v58, 127
    %v95 = vpop.permute.xlu0 %94
    %96 = vrot.lane.b32.xlu0 %v59, 127
    %v97 = vpop.permute.xlu0 %96
    %98 = vrot.lane.b32.xlu0 %v60, 127
    %v99 = vpop.permute.xlu0 %98
    %100 = vrot.lane.b32.xlu0 %v61, 127
    %v101 = vpop.permute.xlu0 %100
    %102 = vrot.lane.b32.xlu0 %v62, 127
    %v103 = vpop.permute.xlu0 %102
    %104 = vrot.lane.b32.xlu0 %v63, 127
    %v105 = vpop.permute.xlu0 %104
    %106 = vrot.lane.b32.xlu0 %v64, 127
    %v107 = vpop.permute.xlu0 %106
    %108 = vrot.lane.b32.xlu0 %v65, 127
    %v109 = vpop.permute.xlu0 %108
    %110 = vrot.lane.b32.xlu0 %v66, 127
    %v111 = vpop.permute.xlu0 %110
    %112 = vrot.lane.b32.xlu0 %v67, 127
    %v113 = vpop.permute.xlu0 %112
    %114 = vrot.lane.b32.xlu0 %v68, 127
    %v115 = vpop.permute.xlu0 %114
    %116 = vrot.lane.b32.xlu0 %v69, 127
    %v117 = vpop.permute.xlu0 %116
    %118 = vrot.lane.b32.xlu0 %v54, 126
    %v119 = vpop.permute.xlu0 %118
    %120 = vrot.lane.b32.xlu0 %v55, 126
    %v121 = vpop.permute.xlu0 %120
    %122 = vrot.lane.b32.xlu0 %v56, 126
    %v123 = vpop.permute.xlu0 %122
    %124 = vrot.lane.b32.xlu0 %v57, 126
    %v125 = vpop.permute.xlu0 %124
    %126 = vrot.lane.b32.xlu0 %v58, 126
    %v127 = vpop.permute.xlu0 %126
    %128 = vrot.lane.b32.xlu0 %v59, 126
    %v129 = vpop.permute.xlu0 %128
    %130 = vrot.lane.b32.xlu0 %v60, 126
    %v131 = vpop.permute.xlu0 %130
    %132 = vrot.lane.b32.xlu0 %v61, 126
    %v133 = vpop.permute.xlu0 %132
    %134 = vrot.lane.b32.xlu0 %v62, 126
    %v135 = vpop.permute.xlu0 %134
    %136 = vrot.lane.b32.xlu0 %v63, 126
    %v137 = vpop.permute.xlu0 %136
    %138 = vrot.lane.b32.xlu0 %v64, 126
    %v139 = vpop.permute.xlu0 %138
    %140 = vrot.lane.b32.xlu0 %v65, 126
    %v141 = vpop.permute.xlu0 %140
    %142 = vrot.lane.b32.xlu0 %v66, 126
    %v143 = vpop.permute.xlu0 %142
    %144 = vrot.lane.b32.xlu0 %v67, 126
    %v145 = vpop.permute.xlu0 %144
    %146 = vrot.lane.b32.xlu0 %v68, 126
    %v147 = vpop.permute.xlu0 %146
    %148 = vrot.lane.b32.xlu0 %v69, 126
    %v149 = vpop.permute.xlu0 %148
    %vm150 = vcmask 1046528
    %v151 = vrot.slane %v54, 1
    %v152 = vrot.slane %v55, 1
    %v153 = vsel %vm150, %v151, %v152
    %v154 = vrot.slane %v56, 1
    %v155 = vrot.slane %v57, 1
    %v156 = vsel %vm150, %v154, %v155
    %v157 = vrot.slane %v58, 1
    %v158 = vrot.slane %v59, 1
    %v159 = vsel %vm150, %v157, %v158
    %v160 = vrot.slane %v60, 1
    %v161 = vrot.slane %v61, 1
    %v162 = vsel %vm150, %v160, %v161
    %v163 = vrot.slane %v62, 1
    %v164 = vrot.slane %v63, 1
    %v165 = vsel %vm150, %v163, %v164
    %v166 = vrot.slane %v64, 1
    %v167 = vrot.slane %v65, 1
    %v168 = vsel %vm150, %v166, %v167
    %v169 = vrot.slane %v66, 1
    %v170 = vrot.slane %v67, 1
    %v171 = vsel %vm150, %v169, %v170
    %v172 = vrot.slane %v68, 1
    %v173 = vrot.slane %v69, 1
    %v174 = vsel %vm150, %v172, %v173
    %175 = vrot.lane.b32.xlu0 %v153, 127
    %v176 = vpop.permute.xlu0 %175
    %177 = vrot.lane.b32.xlu0 %v152, 127
    %v178 = vpop.permute.xlu0 %177
    %179 = vrot.lane.b32.xlu0 %v156, 127
    %v180 = vpop.permute.xlu0 %179
    %181 = vrot.lane.b32.xlu0 %v155, 127
    %v182 = vpop.permute.xlu0 %181
    %183 = vrot.lane.b32.xlu0 %v159, 127
    %v184 = vpop.permute.xlu0 %183
    %185 = vrot.lane.b32.xlu0 %v158, 127
    %v186 = vpop.permute.xlu0 %185
    %187 = vrot.lane.b32.xlu0 %v162, 127
    %v188 = vpop.permute.xlu0 %187
    %189 = vrot.lane.b32.xlu0 %v161, 127
    %v190 = vpop.permute.xlu0 %189
    %191 = vrot.lane.b32.xlu0 %v165, 127
    %v192 = vpop.permute.xlu0 %191
    %193 = vrot.lane.b32.xlu0 %v164, 127
    %v194 = vpop.permute.xlu0 %193
    %195 = vrot.lane.b32.xlu0 %v168, 127
    %v196 = vpop.permute.xlu0 %195
    %197 = vrot.lane.b32.xlu0 %v167, 127
    %v198 = vpop.permute.xlu0 %197
    %199 = vrot.lane.b32.xlu0 %v171, 127
    %v200 = vpop.permute.xlu0 %199
    %201 = vrot.lane.b32.xlu0 %v170, 127
    %v202 = vpop.permute.xlu0 %201
    %203 = vrot.lane.b32.xlu0 %v174, 127
    %v204 = vpop.permute.xlu0 %203
    %205 = vrot.lane.b32.xlu0 %v173, 127
    %v206 = vpop.permute.xlu0 %205
    %207 = vrot.lane.b32.xlu0 %v153, 126
    %v208 = vpop.permute.xlu0 %207
    %209 = vrot.lane.b32.xlu0 %v152, 126
    %v210 = vpop.permute.xlu0 %209
    %211 = vrot.lane.b32.xlu0 %v156, 126
    %v212 = vpop.permute.xlu0 %211
    %213 = vrot.lane.b32.xlu0 %v155, 126
    %v214 = vpop.permute.xlu0 %213
    %215 = vrot.lane.b32.xlu0 %v159, 126
    %v216 = vpop.permute.xlu0 %215
    %217 = vrot.lane.b32.xlu0 %v158, 126
    %v218 = vpop.permute.xlu0 %217
    %219 = vrot.lane.b32.xlu0 %v162, 126
    %v220 = vpop.permute.xlu0 %219
    %221 = vrot.lane.b32.xlu0 %v161, 126
    %v222 = vpop.permute.xlu0 %221
    %223 = vrot.lane.b32.xlu0 %v165, 126
    %v224 = vpop.permute.xlu0 %223
    %225 = vrot.lane.b32.xlu0 %v164, 126
    %v226 = vpop.permute.xlu0 %225
    %227 = vrot.lane.b32.xlu0 %v168, 126
    %v228 = vpop.permute.xlu0 %227
    %229 = vrot.lane.b32.xlu0 %v167, 126
    %v230 = vpop.permute.xlu0 %229
    %231 = vrot.lane.b32.xlu0 %v171, 126
    %v232 = vpop.permute.xlu0 %231
    %233 = vrot.lane.b32.xlu0 %v170, 126
    %v234 = vpop.permute.xlu0 %233
    %235 = vrot.lane.b32.xlu0 %v174, 126
    %v236 = vpop.permute.xlu0 %235
    %237 = vrot.lane.b32.xlu0 %v173, 126
    %v238 = vpop.permute.xlu0 %237
    %vm239 = vcmask 1045504
    %v240 = vrot.slane %v54, 2
    %v241 = vrot.slane %v55, 2
    %v242 = vsel %vm239, %v240, %v241
    %v243 = vrot.slane %v56, 2
    %v244 = vrot.slane %v57, 2
    %v245 = vsel %vm239, %v243, %v244
    %v246 = vrot.slane %v58, 2
    %v247 = vrot.slane %v59, 2
    %v248 = vsel %vm239, %v246, %v247
    %v249 = vrot.slane %v60, 2
    %v250 = vrot.slane %v61, 2
    %v251 = vsel %vm239, %v249, %v250
    %v252 = vrot.slane %v62, 2
    %v253 = vrot.slane %v63, 2
    %v254 = vsel %vm239, %v252, %v253
    %v255 = vrot.slane %v64, 2
    %v256 = vrot.slane %v65, 2
    %v257 = vsel %vm239, %v255, %v256
    %v258 = vrot.slane %v66, 2
    %v259 = vrot.slane %v67, 2
    %v260 = vsel %vm239, %v258, %v259
    %v261 = vrot.slane %v68, 2
    %v262 = vrot.slane %v69, 2
    %v263 = vsel %vm239, %v261, %v262
    %264 = vrot.lane.b32.xlu0 %v242, 127
    %v265 = vpop.permute.xlu0 %264
    %266 = vrot.lane.b32.xlu0 %v241, 127
    %v267 = vpop.permute.xlu0 %266
    %268 = vrot.lane.b32.xlu0 %v245, 127
    %v269 = vpop.permute.xlu0 %268
    %270 = vrot.lane.b32.xlu0 %v244, 127
    %v271 = vpop.permute.xlu0 %270
    %272 = vrot.lane.b32.xlu0 %v248, 127
    %v273 = vpop.permute.xlu0 %272
    %274 = vrot.lane.b32.xlu0 %v247, 127
    %v275 = vpop.permute.xlu0 %274
    %276 = vrot.lane.b32.xlu0 %v251, 127
    %v277 = vpop.permute.xlu0 %276
    %278 = vrot.lane.b32.xlu0 %v250, 127
    %v279 = vpop.permute.xlu0 %278
    %280 = vrot.lane.b32.xlu0 %v254, 127
    %v281 = vpop.permute.xlu0 %280
    %282 = vrot.lane.b32.xlu0 %v253, 127
    %v283 = vpop.permute.xlu0 %282
    %284 = vrot.lane.b32.xlu0 %v257, 127
    %v285 = vpop.permute.xlu0 %284
    %286 = vrot.lane.b32.xlu0 %v256, 127
    %v287 = vpop.permute.xlu0 %286
    %288 = vrot.lane.b32.xlu0 %v260, 127
    %v289 = vpop.permute.xlu0 %288
    %290 = vrot.lane.b32.xlu0 %v259, 127
    %v291 = vpop.permute.xlu0 %290
    %292 = vrot.lane.b32.xlu0 %v263, 127
    %v293 = vpop.permute.xlu0 %292
    %294 = vrot.lane.b32.xlu0 %v262, 127
    %v295 = vpop.permute.xlu0 %294
    %296 = vrot.lane.b32.xlu0 %v242, 126
    %v297 = vpop.permute.xlu0 %296
    %298 = vrot.lane.b32.xlu0 %v241, 126
    %v299 = vpop.permute.xlu0 %298
    %300 = vrot.lane.b32.xlu0 %v245, 126
    %v301 = vpop.permute.xlu0 %300
    %302 = vrot.lane.b32.xlu0 %v244, 126
    %v303 = vpop.permute.xlu0 %302
    %304 = vrot.lane.b32.xlu0 %v248, 126
    %v305 = vpop.permute.xlu0 %304
    %306 = vrot.lane.b32.xlu0 %v247, 126
    %v307 = vpop.permute.xlu0 %306
    %308 = vrot.lane.b32.xlu0 %v251, 126
    %v309 = vpop.permute.xlu0 %308
    %310 = vrot.lane.b32.xlu0 %v250, 126
    %v311 = vpop.permute.xlu0 %310
    %312 = vrot.lane.b32.xlu0 %v254, 126
    %v313 = vpop.permute.xlu0 %312
    %314 = vrot.lane.b32.xlu0 %v253, 126
    %v315 = vpop.permute.xlu0 %314
    %316 = vrot.lane.b32.xlu0 %v257, 126
    %v317 = vpop.permute.xlu0 %316
    %318 = vrot.lane.b32.xlu0 %v256, 126
    %v319 = vpop.permute.xlu0 %318
    %320 = vrot.lane.b32.xlu0 %v260, 126
    %v321 = vpop.permute.xlu0 %320
    %322 = vrot.lane.b32.xlu0 %v259, 126
    %v323 = vpop.permute.xlu0 %322
    %324 = vrot.lane.b32.xlu0 %v263, 126
    %v325 = vpop.permute.xlu0 %324
    %326 = vrot.lane.b32.xlu0 %v262, 126
    %v327 = vpop.permute.xlu0 %326
    %v328 = vrot.slane %v56, 7
    %vm329 = vcmask 1041409
    %v330 = vsel %vm329, %v328, %v54
    %v331 = vrot.slane %v58, 6
    %vm332 = vcmask 1042434
    %v333 = vsel %vm332, %v331, %v330
    %v334 = vrot.slane %v60, 5
    %vm335 = vcmask 1043459
    %v336 = vsel %vm335, %v334, %v333
    %v337 = vrot.slane %v87, 4
    %vm338 = vcmask 1044484
    %v339 = vsel %vm338, %v337, %v336
    %v340 = vrot.slane %v91, 3
    %vm341 = vcmask 1045509
    %v342 = vsel %vm341, %v340, %v339
    %v343 = vrot.slane %v95, 2
    %vm344 = vcmask 1046534
    %v345 = vsel %vm344, %v343, %v342
    %v346 = vrot.slane %v99, 1
    %vm347 = vcmask 1047559
    %v348 = vsel %vm347, %v346, %v345
    %v349 = vrot.slane %v123, 7
    %v350 = vsel %vm329, %v349, %v119
    %v351 = vrot.slane %v127, 6
    %v352 = vsel %vm332, %v351, %v350
    %v353 = vrot.slane %v131, 5
    %v354 = vsel %vm335, %v353, %v352
    %v355 = vrot.slane %v153, 4
    %v356 = vsel %vm338, %v355, %v354
    %v357 = vrot.slane %v156, 3
    %v358 = vsel %vm341, %v357, %v356
    %v359 = vrot.slane %v159, 2
    %v360 = vsel %vm344, %v359, %v358
    %v361 = vrot.slane %v162, 1
    %v362 = vsel %vm347, %v361, %v360
    %v363 = vrot.slane %v180, 7
    %v364 = vsel %vm329, %v363, %v176
    %v365 = vrot.slane %v184, 6
    %v366 = vsel %vm332, %v365, %v364
    %v367 = vrot.slane %v188, 5
    %v368 = vsel %vm335, %v367, %v366
    %v369 = vrot.slane %v208, 4
    %v370 = vsel %vm338, %v369, %v368
    %v371 = vrot.slane %v212, 3
    %v372 = vsel %vm341, %v371, %v370
    %v373 = vrot.slane %v216, 2
    %v374 = vsel %vm344, %v373, %v372
    %v375 = vrot.slane %v220, 1
    %v376 = vsel %vm347, %v375, %v374
    %v377 = vrot.slane %v245, 7
    %v378 = vsel %vm329, %v377, %v242
    %v379 = vrot.slane %v248, 6
    %v380 = vsel %vm332, %v379, %v378
    %v381 = vrot.slane %v251, 5
    %v382 = vsel %vm335, %v381, %v380
    %v383 = vrot.slane %v265, 4
    %v384 = vsel %vm338, %v383, %v382
    %v385 = vrot.slane %v269, 3
    %v386 = vsel %vm341, %v385, %v384
    %v387 = vrot.slane %v273, 2
    %v388 = vsel %vm344, %v387, %v386
    %v389 = vrot.slane %v277, 1
    %v390 = vsel %vm347, %v389, %v388
    %v391 = vrot.slane %v301, 7
    %v392 = vsel %vm329, %v391, %v297
    %v393 = vrot.slane %v305, 6
    %v394 = vsel %vm332, %v393, %v392
    %v395 = vrot.slane %v309, 5
    %v396 = vsel %vm335, %v395, %v394
    %vm402 = vcmask 113664
    %403 = vst.msk [vmem:[#allocation2] sm:$0xff] %vm402, %v348
    %404 = vst.msk [vmem:[#allocation2 + $0x20] sm:$0xff] %vm402, %v362
    %405 = vst.msk [vmem:[#allocation2 + $0x40] sm:$0xff] %vm402, %v376
    %406 = vst.msk [vmem:[#allocation2 + $0x60] sm:$0xff] %vm402, %v390
    %vm407 = vcmask 109568
    %408 = vst.msk [vmem:[#allocation2 + $0x80] sm:$0xf] %vm407, %v396
    %v409 = vsel %vm329, %v56, %v151
    %v410 = vrot.slane %v58, 7
    %v411 = vsel %vm332, %v410, %v409
    %v412 = vrot.slane %v60, 6
    %v413 = vsel %vm335, %v412, %v411
    %v414 = vrot.slane %v87, 5
    %v415 = vsel %vm338, %v414, %v413
    %v416 = vrot.slane %v91, 4
    %v417 = vsel %vm341, %v416, %v415
    %v418 = vrot.slane %v95, 3
    %v419 = vsel %vm344, %v418, %v417
    %v420 = vrot.slane %v99, 2
    %v421 = vsel %vm347, %v420, %v419
    %v422 = vrot.slane %v119, 1
    %v423 = vsel %vm329, %v123, %v422
    %v424 = vrot.slane %v127, 7
    %v425 = vsel %vm332, %v424, %v423
    %v426 = vrot.slane %v131, 6
    %v427 = vsel %vm335, %v426, %v425
    %v428 = vrot.slane %v153, 5
    %v429 = vsel %vm338, %v428, %v427
    %v430 = vrot.slane %v156, 4
    %v431 = vsel %vm341, %v430, %v429
    %v432 = vrot.slane %v159, 3
    %v433 = vsel %vm344, %v432, %v431
    %v434 = vrot.slane %v162, 2
    %v435 = vsel %vm347, %v434, %v433
    %v436 = vrot.slane %v176, 1
    %v437 = vsel %vm329, %v180, %v436
    %v438 = vrot.slane %v184, 7
    %v439 = vsel %vm332, %v438, %v437
    %v440 = vrot.slane %v188, 6
    %v441 = vsel %vm335, %v440, %v439
    %v442 = vrot.slane %v208, 5
    %v443 = vsel %vm338, %v442, %v441
    %v444 = vrot.slane %v212, 4
    %v445 = vsel %vm341, %v444, %v443
    %v446 = vrot.slane %v216, 3
    %v447 = vsel %vm344, %v446, %v445
    %v448 = vrot.slane %v220, 2
    %v449 = vsel %vm347, %v448, %v447
    %v450 = vrot.slane %v242, 1
    %v451 = vsel %vm329, %v245, %v450
    %v452 = vrot.slane %v248, 7
    %v453 = vsel %vm332, %v452, %v451
    %v454 = vrot.slane %v251, 6
    %v455 = vsel %vm335, %v454, %v453
    %v456 = vrot.slane %v265, 5
    %v457 = vsel %vm338, %v456, %v455
    %v458 = vrot.slane %v269, 4
    %v459 = vsel %vm341, %v458, %v457
    %v460 = vrot.slane %v273, 3
    %v461 = vsel %vm344, %v460, %v459
    %v462 = vrot.slane %v277, 2
    %v463 = vsel %vm347, %v462, %v461
    %v464 = vrot.slane %v297, 1
    %v465 = vsel %vm329, %v301, %v464
    %v466 = vrot.slane %v305, 7
    %v467 = vsel %vm332, %v466, %v465
    %v468 = vrot.slane %v309, 6
    %v469 = vsel %vm335, %v468, %v467
    %470 = vrot.lane.b32.xlu0 %v421, 14
    %v471 = vpop.permute.xlu0 %470
    %472 = vrot.lane.b32.xlu0 %v435, 14
    %v473 = vpop.permute.xlu0 %472
    %474 = vrot.lane.b32.xlu0 %v449, 14
    %v475 = vpop.permute.xlu0 %474
    %476 = vrot.lane.b32.xlu0 %v463, 14
    %v477 = vpop.permute.xlu0 %476
    %478 = vrot.lane.b32.xlu0 %v469, 14
    %v479 = vpop.permute.xlu0 %478
    %vm485 = vcmask 228464
    %486 = vst.msk [vmem:[#allocation2] sm:$0xff] %vm485, %v471
    %487 = vst.msk [vmem:[#allocation2 + $0x20] sm:$0xff] %vm485, %v473
    %488 = vst.msk [vmem:[#allocation2 + $0x40] sm:$0xff] %vm485, %v475
    %489 = vst.msk [vmem:[#allocation2 + $0x60] sm:$0xff] %vm485, %v477
    %vm490 = vcmask 224368
    %491 = vst.msk [vmem:[#allocation2 + $0x80] sm:$0xf] %vm490, %v479
    %v492 = vsel %vm329, %v154, %v240
    %v493 = vsel %vm332, %v58, %v492
    %v494 = vrot.slane %v60, 7
    %v495 = vsel %vm335, %v494, %v493
    %v496 = vrot.slane %v87, 6
    %v497 = vsel %vm338, %v496, %v495
    %v498 = vrot.slane %v91, 5
    %v499 = vsel %vm341, %v498, %v497
    %v500 = vrot.slane %v95, 4
    %v501 = vsel %vm344, %v500, %v499
    %v502 = vrot.slane %v99, 3
    %v503 = vsel %vm347, %v502, %v501
    %v504 = vrot.slane %v119, 2
    %v505 = vrot.slane %v123, 1
    %v506 = vsel %vm329, %v505, %v504
    %v507 = vsel %vm332, %v127, %v506
    %v508 = vrot.slane %v131, 7
    %v509 = vsel %vm335, %v508, %v507
    %v510 = vrot.slane %v153, 6
    %v511 = vsel %vm338, %v510, %v509
    %v512 = vrot.slane %v156, 5
    %v513 = vsel %vm341, %v512, %v511
    %v514 = vrot.slane %v159, 4
    %v515 = vsel %vm344, %v514, %v513
    %v516 = vrot.slane %v162, 3
    %v517 = vsel %vm347, %v516, %v515
    %v518 = vrot.slane %v176, 2
    %v519 = vrot.slane %v180, 1
    %v520 = vsel %vm329, %v519, %v518
    %v521 = vsel %vm332, %v184, %v520
    %v522 = vrot.slane %v188, 7
    %v523 = vsel %vm335, %v522, %v521
    %v524 = vrot.slane %v208, 6
    %v525 = vsel %vm338, %v524, %v523
    %v526 = vrot.slane %v212, 5
    %v527 = vsel %vm341, %v526, %v525
    %v528 = vrot.slane %v216, 4
    %v529 = vsel %vm344, %v528, %v527
    %v530 = vrot.slane %v220, 3
    %v531 = vsel %vm347, %v530, %v529
    %v532 = vrot.slane %v242, 2
    %v533 = vrot.slane %v245, 1
    %v534 = vsel %vm329, %v533, %v532
    %v535 = vsel %vm332, %v248, %v534
    %v536 = vrot.slane %v251, 7
    %v537 = vsel %vm335, %v536, %v535
    %v538 = vrot.slane %v265, 6
    %v539 = vsel %vm338, %v538, %v537
    %v540 = vrot.slane %v269, 5
    %v541 = vsel %vm341, %v540, %v539
    %v542 = vrot.slane %v273, 4
    %v543 = vsel %vm344, %v542, %v541
    %v544 = vrot.slane %v277, 3
    %v545 = vsel %vm347, %v544, %v543
    %v546 = vrot.slane %v297, 2
    %v547 = vrot.slane %v301, 1
    %v548 = vsel %vm329, %v547, %v546
    %v549 = vsel %vm332, %v305, %v548
    %v550 = vrot.slane %v309, 7
    %v551 = vsel %vm335, %v550, %v549
    %552 = vrot.lane.b32.xlu0 %v503, 28
    %v553 = vpop.permute.xlu0 %552
    %554 = vrot.lane.b32.xlu0 %v517, 28
    %v555 = vpop.permute.xlu0 %554
    %556 = vrot.lane.b32.xlu0 %v531, 28
    %v557 = vpop.permute.xlu0 %556
    %558 = vrot.lane.b32.xlu0 %v545, 28
    %v559 = vpop.permute.xlu0 %558
    %560 = vrot.lane.b32.xlu0 %v551, 28
    %v561 = vpop.permute.xlu0 %560
    %vm567 = vcmask 343264
    %568 = vst.msk [vmem:[#allocation2] sm:$0xff] %vm567, %v553
    %569 = vst.msk [vmem:[#allocation2 + $0x20] sm:$0xff] %vm567, %v555
    %570 = vst.msk [vmem:[#allocation2 + $0x40] sm:$0xff] %vm567, %v557
    %571 = vst.msk [vmem:[#allocation2 + $0x60] sm:$0xff] %vm567, %v559
    %vm572 = vcmask 339168
    %573 = vst.msk [vmem:[#allocation2 + $0x80] sm:$0xf] %vm572, %v561
    %v574 = vrot.slane %v54, 3
    %v575 = vsel %vm329, %v243, %v574
    %v576 = vsel %vm332, %v157, %v575
    %v577 = vsel %vm335, %v60, %v576
    %v578 = vrot.slane %v87, 7
    %v579 = vsel %vm338, %v578, %v577
    %v580 = vrot.slane %v91, 6
    %v581 = vsel %vm341, %v580, %v579
    %v582 = vrot.slane %v95, 5
    %v583 = vsel %vm344, %v582, %v581
    %v584 = vrot.slane %v99, 4
    %v585 = vsel %vm347, %v584, %v583
    %v586 = vrot.slane %v119, 3
    %v587 = vrot.slane %v123, 2
    %v588 = vsel %vm329, %v587, %v586
    %v589 = vrot.slane %v127, 1
    %v590 = vsel %vm332, %v589, %v588
    %v591 = vsel %vm335, %v131, %v590
    %v592 = vrot.slane %v153, 7
    %v593 = vsel %vm338, %v592, %v591
    %v594 = vrot.slane %v156, 6
    %v595 = vsel %vm341, %v594, %v593
    %v596 = vrot.slane %v159, 5
    %v597 = vsel %vm344, %v596, %v595
    %v598 = vrot.slane %v162, 4
    %v599 = vsel %vm347, %v598, %v597
    %v600 = vrot.slane %v176, 3
    %v601 = vrot.slane %v180, 2
    %v602 = vsel %vm329, %v601, %v600
    %v603 = vrot.slane %v184, 1
    %v604 = vsel %vm332, %v603, %v602
    %v605 = vsel %vm335, %v188, %v604
    %v606 = vrot.slane %v208, 7
    %v607 = vsel %vm338, %v606, %v605
    %v608 = vrot.slane %v212, 6
    %v609 = vsel %vm341, %v608, %v607
    %v610 = vrot.slane %v216, 5
    %v611 = vsel %vm344, %v610, %v609
    %v612 = vrot.slane %v220, 4
    %v613 = vsel %vm347, %v612, %v611
    %v614 = vrot.slane %v242, 3
    %v615 = vrot.slane %v245, 2
    %v616 = vsel %vm329, %v615, %v614
    %v617 = vrot.slane %v248, 1
    %v618 = vsel %vm332, %v617, %v616
    %v619 = vsel %vm335, %v251, %v618
    %v620 = vrot.slane %v265, 7
    %v621 = vsel %vm338, %v620, %v619
    %v622 = vrot.slane %v269, 6
    %v623 = vsel %vm341, %v622, %v621
    %v624 = vrot.slane %v273, 5
    %v625 = vsel %vm344, %v624, %v623
    %v626 = vrot.slane %v277, 4
    %v627 = vsel %vm347, %v626, %v625
    %v628 = vrot.slane %v297, 3
    %v629 = vrot.slane %v301, 2
    %v630 = vsel %vm329, %v629, %v628
    %v631 = vrot.slane %v305, 1
    %v632 = vsel %vm332, %v631, %v630
    %v633 = vsel %vm335, %v309, %v632
    %634 = vrot.lane.b32.xlu0 %v585, 42
    %v635 = vpop.permute.xlu0 %634
    %636 = vrot.lane.b32.xlu0 %v599, 42
    %v637 = vpop.permute.xlu0 %636
    %638 = vrot.lane.b32.xlu0 %v613, 42
    %v639 = vpop.permute.xlu0 %638
    %640 = vrot.lane.b32.xlu0 %v627, 42
    %v641 = vpop.permute.xlu0 %640
    %642 = vrot.lane.b32.xlu0 %v633, 42
    %v643 = vpop.permute.xlu0 %642
    %vm649 = vcmask 458064
    %650 = vst.msk [vmem:[#allocation2] sm:$0xff] %vm649, %v635
    %651 = vst.msk [vmem:[#allocation2 + $0x20] sm:$0xff] %vm649, %v637
    %652 = vst.msk [vmem:[#allocation2 + $0x40] sm:$0xff] %vm649, %v639
    %653 = vst.msk [vmem:[#allocation2 + $0x60] sm:$0xff] %vm649, %v641
    %vm654 = vcmask 453968
    %655 = vst.msk [vmem:[#allocation2 + $0x80] sm:$0xf] %vm654, %v643
    %v656 = vrot.slane %v54, 4
    %v657 = vrot.slane %v56, 3
    %v658 = vsel %vm329, %v657, %v656
    %v659 = vsel %vm332, %v246, %v658
    %v660 = vsel %vm335, %v160, %v659
    %v661 = vsel %vm338, %v87, %v660
    %v662 = vrot.slane %v91, 7
    %v663 = vsel %vm341, %v662, %v661
    %v664 = vrot.slane %v95, 6
    %v665 = vsel %vm344, %v664, %v663
    %v666 = vrot.slane %v99, 5
    %v667 = vsel %vm347, %v666, %v665
    %v668 = vrot.slane %v119, 4
    %v669 = vrot.slane %v123, 3
    %v670 = vsel %vm329, %v669, %v668
    %v671 = vrot.slane %v127, 2
    %v672 = vsel %vm332, %v671, %v670
    %v673 = vrot.slane %v131, 1
    %v674 = vsel %vm335, %v673, %v672
    %v675 = vsel %vm338, %v153, %v674
    %v676 = vrot.slane %v156, 7
    %v677 = vsel %vm341, %v676, %v675
    %v678 = vrot.slane %v159, 6
    %v679 = vsel %vm344, %v678, %v677
    %v680 = vrot.slane %v162, 5
    %v681 = vsel %vm347, %v680, %v679
    %v682 = vrot.slane %v176, 4
    %v683 = vrot.slane %v180, 3
    %v684 = vsel %vm329, %v683, %v682
    %v685 = vrot.slane %v184, 2
    %v686 = vsel %vm332, %v685, %v684
    %v687 = vrot.slane %v188, 1
    %v688 = vsel %vm335, %v687, %v686
    %v689 = vsel %vm338, %v208, %v688
    %v690 = vrot.slane %v212, 7
    %v691 = vsel %vm341, %v690, %v689
    %v692 = vrot.slane %v216, 6
    %v693 = vsel %vm344, %v692, %v691
    %v694 = vrot.slane %v220, 5
    %v695 = vsel %vm347, %v694, %v693
    %v696 = vrot.slane %v242, 4
    %v697 = vrot.slane %v245, 3
    %v698 = vsel %vm329, %v697, %v696
    %v699 = vrot.slane %v248, 2
    %v700 = vsel %vm332, %v699, %v698
    %v701 = vrot.slane %v251, 1
    %v702 = vsel %vm335, %v701, %v700
    %v703 = vsel %vm338, %v265, %v702
    %v704 = vrot.slane %v269, 7
    %v705 = vsel %vm341, %v704, %v703
    %v706 = vrot.slane %v273, 6
    %v707 = vsel %vm344, %v706, %v705
    %v708 = vrot.slane %v277, 5
    %v709 = vsel %vm347, %v708, %v707
    %v710 = vrot.slane %v297, 4
    %v711 = vrot.slane %v301, 3
    %v712 = vsel %vm329, %v711, %v710
    %v713 = vrot.slane %v305, 2
    %v714 = vsel %vm332, %v713, %v712
    %v715 = vrot.slane %v309, 1
    %v716 = vsel %vm335, %v715, %v714
    %717 = vrot.lane.b32.xlu0 %v667, 56
    %v718 = vpop.permute.xlu0 %717
    %719 = vrot.lane.b32.xlu0 %v681, 56
    %v720 = vpop.permute.xlu0 %719
    %721 = vrot.lane.b32.xlu0 %v695, 56
    %v722 = vpop.permute.xlu0 %721
    %723 = vrot.lane.b32.xlu0 %v709, 56
    %v724 = vpop.permute.xlu0 %723
    %725 = vrot.lane.b32.xlu0 %v716, 56
    %v726 = vpop.permute.xlu0 %725
    %vm732 = vcmask 572864
    %733 = vst.msk [vmem:[#allocation2] sm:$0xff] %vm732, %v718
    %734 = vst.msk [vmem:[#allocation2 + $0x20] sm:$0xff] %vm732, %v720
    %735 = vst.msk [vmem:[#allocation2 + $0x40] sm:$0xff] %vm732, %v722
    %736 = vst.msk [vmem:[#allocation2 + $0x60] sm:$0xff] %vm732, %v724
    %vm737 = vcmask 568768
    %738 = vst.msk [vmem:[#allocation2 + $0x80] sm:$0xf] %vm737, %v726
    %v739 = vrot.slane %v54, 5
    %v740 = vrot.slane %v56, 4
    %v741 = vsel %vm329, %v740, %v739
    %v742 = vrot.slane %v58, 3
    %v743 = vsel %vm332, %v742, %v741
    %v744 = vsel %vm335, %v249, %v743
    %v745 = vrot.slane %v87, 1
    %v746 = vsel %vm338, %v745, %v744
    %v747 = vsel %vm341, %v91, %v746
    %v748 = vrot.slane %v95, 7
    %v749 = vsel %vm344, %v748, %v747
    %v750 = vrot.slane %v99, 6
    %v751 = vsel %vm347, %v750, %v749
    %v752 = vrot.slane %v119, 5
    %v753 = vrot.slane %v123, 4
    %v754 = vsel %vm329, %v753, %v752
    %v755 = vrot.slane %v127, 3
    %v756 = vsel %vm332, %v755, %v754
    %v757 = vrot.slane %v131, 2
    %v758 = vsel %vm335, %v757, %v756
    %v759 = vrot.slane %v153, 1
    %v760 = vsel %vm338, %v759, %v758
    %v761 = vsel %vm341, %v156, %v760
    %v762 = vrot.slane %v159, 7
    %v763 = vsel %vm344, %v762, %v761
    %v764 = vrot.slane %v162, 6
    %v765 = vsel %vm347, %v764, %v763
    %v766 = vrot.slane %v176, 5
    %v767 = vrot.slane %v180, 4
    %v768 = vsel %vm329, %v767, %v766
    %v769 = vrot.slane %v184, 3
    %v770 = vsel %vm332, %v769, %v768
    %v771 = vrot.slane %v188, 2
    %v772 = vsel %vm335, %v771, %v770
    %v773 = vrot.slane %v208, 1
    %v774 = vsel %vm338, %v773, %v772
    %v775 = vsel %vm341, %v212, %v774
    %v776 = vrot.slane %v216, 7
    %v777 = vsel %vm344, %v776, %v775
    %v778 = vrot.slane %v220, 6
    %v779 = vsel %vm347, %v778, %v777
    %v780 = vrot.slane %v242, 5
    %v781 = vrot.slane %v245, 4
    %v782 = vsel %vm329, %v781, %v780
    %v783 = vrot.slane %v248, 3
    %v784 = vsel %vm332, %v783, %v782
    %v785 = vrot.slane %v251, 2
    %v786 = vsel %vm335, %v785, %v784
    %v787 = vrot.slane %v265, 1
    %v788 = vsel %vm338, %v787, %v786
    %v789 = vsel %vm341, %v269, %v788
    %v790 = vrot.slane %v273, 7
    %v791 = vsel %vm344, %v790, %v789
    %v792 = vrot.slane %v277, 6
    %v793 = vsel %vm347, %v792, %v791
    %v794 = vrot.slane %v297, 5
    %v795 = vrot.slane %v301, 4
    %v796 = vsel %vm329, %v795, %v794
    %v797 = vrot.slane %v305, 3
    %v798 = vsel %vm332, %v797, %v796
    %v799 = vrot.slane %v309, 2
    %v800 = vsel %vm335, %v799, %v798
    %801 = vrot.lane.b32.xlu0 %v751, 70
    %v802 = vpop.permute.xlu0 %801
    %803 = vrot.lane.b32.xlu0 %v765, 70
    %v804 = vpop.permute.xlu0 %803
    %805 = vrot.lane.b32.xlu0 %v779, 70
    %v806 = vpop.permute.xlu0 %805
    %807 = vrot.lane.b32.xlu0 %v793, 70
    %v808 = vpop.permute.xlu0 %807
    %809 = vrot.lane.b32.xlu0 %v800, 70
    %v810 = vpop.permute.xlu0 %809
    %vm816 = vcmask 687664
    %817 = vst.msk [vmem:[#allocation2] sm:$0xff] %vm816, %v802
    %818 = vst.msk [vmem:[#allocation2 + $0x20] sm:$0xff] %vm816, %v804
    %819 = vst.msk [vmem:[#allocation2 + $0x40] sm:$0xff] %vm816, %v806
    %820 = vst.msk [vmem:[#allocation2 + $0x60] sm:$0xff] %vm816, %v808
    %vm821 = vcmask 683568
    %822 = vst.msk [vmem:[#allocation2 + $0x80] sm:$0xf] %vm821, %v810
    %v823 = vrot.slane %v54, 6
    %v824 = vrot.slane %v56, 5
    %v825 = vsel %vm329, %v824, %v823
    %v826 = vrot.slane %v58, 4
    %v827 = vsel %vm332, %v826, %v825
    %v828 = vrot.slane %v60, 3
    %v829 = vsel %vm335, %v828, %v827
    %v830 = vrot.slane %v87, 2
    %v831 = vsel %vm338, %v830, %v829
    %v832 = vrot.slane %v91, 1
    %v833 = vsel %vm341, %v832, %v831
    %v834 = vsel %vm344, %v95, %v833
    %v835 = vrot.slane %v99, 7
    %v836 = vsel %vm347, %v835, %v834
    %v837 = vrot.slane %v119, 6
    %v838 = vrot.slane %v123, 5
    %v839 = vsel %vm329, %v838, %v837
    %v840 = vrot.slane %v127, 4
    %v841 = vsel %vm332, %v840, %v839
    %v842 = vrot.slane %v131, 3
    %v843 = vsel %vm335, %v842, %v841
    %v844 = vrot.slane %v153, 2
    %v845 = vsel %vm338, %v844, %v843
    %v846 = vrot.slane %v156, 1
    %v847 = vsel %vm341, %v846, %v845
    %v848 = vsel %vm344, %v159, %v847
    %v849 = vrot.slane %v162, 7
    %v850 = vsel %vm347, %v849, %v848
    %v851 = vrot.slane %v176, 6
    %v852 = vrot.slane %v180, 5
    %v853 = vsel %vm329, %v852, %v851
    %v854 = vrot.slane %v184, 4
    %v855 = vsel %vm332, %v854, %v853
    %v856 = vrot.slane %v188, 3
    %v857 = vsel %vm335, %v856, %v855
    %v858 = vrot.slane %v208, 2
    %v859 = vsel %vm338, %v858, %v857
    %v860 = vrot.slane %v212, 1
    %v861 = vsel %vm341, %v860, %v859
    %v862 = vsel %vm344, %v216, %v861
    %v863 = vrot.slane %v220, 7
    %v864 = vsel %vm347, %v863, %v862
    %v865 = vrot.slane %v242, 6
    %v866 = vrot.slane %v245, 5
    %v867 = vsel %vm329, %v866, %v865
    %v868 = vrot.slane %v248, 4
    %v869 = vsel %vm332, %v868, %v867
    %v870 = vrot.slane %v251, 3
    %v871 = vsel %vm335, %v870, %v869
    %v872 = vrot.slane %v265, 2
    %v873 = vsel %vm338, %v872, %v871
    %v874 = vrot.slane %v269, 1
    %v875 = vsel %vm341, %v874, %v873
    %v876 = vsel %vm344, %v273, %v875
    %v877 = vrot.slane %v277, 7
    %v878 = vsel %vm347, %v877, %v876
    %v879 = vrot.slane %v297, 6
    %v880 = vrot.slane %v301, 5
    %v881 = vsel %vm329, %v880, %v879
    %v882 = vrot.slane %v305, 4
    %v883 = vsel %vm332, %v882, %v881
    %v884 = vrot.slane %v309, 3
    %v885 = vsel %vm335, %v884, %v883
    %886 = vrot.lane.b32.xlu0 %v836, 84
    %v887 = vpop.permute.xlu0 %886
    %888 = vrot.lane.b32.xlu0 %v850, 84
    %v889 = vpop.permute.xlu0 %888
    %890 = vrot.lane.b32.xlu0 %v864, 84
    %v891 = vpop.permute.xlu0 %890
    %892 = vrot.lane.b32.xlu0 %v878, 84
    %v893 = vpop.permute.xlu0 %892
    %894 = vrot.lane.b32.xlu0 %v885, 84
    %v895 = vpop.permute.xlu0 %894
    %vm901 = vcmask 802464
    %902 = vst.msk [vmem:[#allocation2] sm:$0xff] %vm901, %v887
    %903 = vst.msk [vmem:[#allocation2 + $0x20] sm:$0xff] %vm901, %v889
    %904 = vst.msk [vmem:[#allocation2 + $0x40] sm:$0xff] %vm901, %v891
    %905 = vst.msk [vmem:[#allocation2 + $0x60] sm:$0xff] %vm901, %v893
    %vm906 = vcmask 798368
    %907 = vst.msk [vmem:[#allocation2 + $0x80] sm:$0xf] %vm906, %v895
    %v908 = vrot.slane %v54, 7
    %v909 = vrot.slane %v56, 6
    %v910 = vsel %vm329, %v909, %v908
    %v911 = vrot.slane %v58, 5
    %v912 = vsel %vm332, %v911, %v910
    %v913 = vrot.slane %v60, 4
    %v914 = vsel %vm335, %v913, %v912
    %v915 = vrot.slane %v87, 3
    %v916 = vsel %vm338, %v915, %v914
    %v917 = vrot.slane %v91, 2
    %v918 = vsel %vm341, %v917, %v916
    %v919 = vrot.slane %v95, 1
    %v920 = vsel %vm344, %v919, %v918
    %v921 = vsel %vm347, %v99, %v920
    %v922 = vrot.slane %v119, 7
    %v923 = vrot.slane %v123, 6
    %v924 = vsel %vm329, %v923, %v922
    %v925 = vrot.slane %v127, 5
    %v926 = vsel %vm332, %v925, %v924
    %v927 = vrot.slane %v131, 4
    %v928 = vsel %vm335, %v927, %v926
    %v929 = vrot.slane %v153, 3
    %v930 = vsel %vm338, %v929, %v928
    %v931 = vrot.slane %v156, 2
    %v932 = vsel %vm341, %v931, %v930
    %v933 = vrot.slane %v159, 1
    %v934 = vsel %vm344, %v933, %v932
    %v935 = vsel %vm347, %v162, %v934
    %v936 = vrot.slane %v176, 7
    %v937 = vrot.slane %v180, 6
    %v938 = vsel %vm329, %v937, %v936
    %v939 = vrot.slane %v184, 5
    %v940 = vsel %vm332, %v939, %v938
    %v941 = vrot.slane %v188, 4
    %v942 = vsel %vm335, %v941, %v940
    %v943 = vrot.slane %v208, 3
    %v944 = vsel %vm338, %v943, %v942
    %v945 = vrot.slane %v212, 2
    %v946 = vsel %vm341, %v945, %v944
    %v947 = vrot.slane %v216, 1
    %v948 = vsel %vm344, %v947, %v946
    %v949 = vsel %vm347, %v220, %v948
    %v950 = vrot.slane %v242, 7
    %v951 = vrot.slane %v245, 6
    %v952 = vsel %vm329, %v951, %v950
    %v953 = vrot.slane %v248, 5
    %v954 = vsel %vm332, %v953, %v952
    %v955 = vrot.slane %v251, 4
    %v956 = vsel %vm335, %v955, %v954
    %v957 = vrot.slane %v265, 3
    %v958 = vsel %vm338, %v957, %v956
    %v959 = vrot.slane %v269, 2
    %v960 = vsel %vm341, %v959, %v958
    %v961 = vrot.slane %v273, 1
    %v962 = vsel %vm344, %v961, %v960
    %v963 = vsel %vm347, %v277, %v962
    %v964 = vrot.slane %v297, 7
    %v965 = vrot.slane %v301, 6
    %v966 = vsel %vm329, %v965, %v964
    %v967 = vrot.slane %v305, 5
    %v968 = vsel %vm332, %v967, %v966
    %v969 = vrot.slane %v309, 4
    %v970 = vsel %vm335, %v969, %v968
    %971 = vrot.lane.b32.xlu0 %v921, 98
    %v972 = vpop.permute.xlu0 %971
    %973 = vrot.lane.b32.xlu0 %v935, 98
    %v974 = vpop.permute.xlu0 %973
    %975 = vrot.lane.b32.xlu0 %v949, 98
    %v976 = vpop.permute.xlu0 %975
    %977 = vrot.lane.b32.xlu0 %v963, 98
    %v978 = vpop.permute.xlu0 %977
    %979 = vrot.lane.b32.xlu0 %v970, 98
    %v980 = vpop.permute.xlu0 %979
    %vm986 = vcmask 917264
    %987 = vst.msk [vmem:[#allocation2] sm:$0xff] %vm986, %v972
    %988 = vst.msk [vmem:[#allocation2 + $0x20] sm:$0xff] %vm986, %v974
    %989 = vst.msk [vmem:[#allocation2 + $0x40] sm:$0xff] %vm986, %v976
    %990 = vst.msk [vmem:[#allocation2 + $0x60] sm:$0xff] %vm986, %v978
    %vm991 = vcmask 913168
    %992 = vst.msk [vmem:[#allocation2 + $0x80] sm:$0xf] %vm991, %v980
    %v993 = vrot.slane %v57, 7
    %v994 = vsel %vm329, %v993, %v55
    %v995 = vrot.slane %v59, 6
    %v996 = vsel %vm332, %v995, %v994
    %v997 = vrot.slane %v61, 5
    %v998 = vsel %vm335, %v997, %v996
    %v999 = vrot.slane %v89, 4
    %v1000 = vsel %vm338, %v999, %v998
    %v1001 = vrot.slane %v93, 3
    %v1002 = vsel %vm341, %v1001, %v1000
    %v1003 = vrot.slane %v97, 2
    %v1004 = vsel %vm344, %v1003, %v1002
    %v1005 = vrot.slane %v101, 1
    %v1006 = vsel %vm347, %v1005, %v1004
    %v1007 = vrot.slane %v125, 7
    %v1008 = vsel %vm329, %v1007, %v121
    %v1009 = vrot.slane %v129, 6
    %v1010 = vsel %vm332, %v1009, %v1008
    %v1011 = vrot.slane %v133, 5
    %v1012 = vsel %vm335, %v1011, %v1010
    %v1013 = vrot.slane %v152, 4
    %v1014 = vsel %vm338, %v1013, %v1012
    %v1015 = vrot.slane %v155, 3
    %v1016 = vsel %vm341, %v1015, %v1014
    %v1017 = vrot.slane %v158, 2
    %v1018 = vsel %vm344, %v1017, %v1016
    %v1019 = vrot.slane %v161, 1
    %v1020 = vsel %vm347, %v1019, %v1018
    %v1021 = vrot.slane %v182, 7
    %v1022 = vsel %vm329, %v1021, %v178
    %v1023 = vrot.slane %v186, 6
    %v1024 = vsel %vm332, %v1023, %v1022
    %v1025 = vrot.slane %v190, 5
    %v1026 = vsel %vm335, %v1025, %v1024
    %v1027 = vrot.slane %v210, 4
    %v1028 = vsel %vm338, %v1027, %v1026
    %v1029 = vrot.slane %v214, 3
    %v1030 = vsel %vm341, %v1029, %v1028
    %v1031 = vrot.slane %v218, 2
    %v1032 = vsel %vm344, %v1031, %v1030
    %v1033 = vrot.slane %v222, 1
    %v1034 = vsel %vm347, %v1033, %v1032
    %v1035 = vrot.slane %v244, 7
    %v1036 = vsel %vm329, %v1035, %v241
    %v1037 = vrot.slane %v247, 6
    %v1038 = vsel %vm332, %v1037, %v1036
    %v1039 = vrot.slane %v250, 5
    %v1040 = vsel %vm335, %v1039, %v1038
    %v1041 = vrot.slane %v267, 4
    %v1042 = vsel %vm338, %v1041, %v1040
    %v1043 = vrot.slane %v271, 3
    %v1044 = vsel %vm341, %v1043, %v1042
    %v1045 = vrot.slane %v275, 2
    %v1046 = vsel %vm344, %v1045, %v1044
    %v1047 = vrot.slane %v279, 1
    %v1048 = vsel %vm347, %v1047, %v1046
    %v1049 = vrot.slane %v303, 7
    %v1050 = vsel %vm329, %v1049, %v299
    %v1051 = vrot.slane %v307, 6
    %v1052 = vsel %vm332, %v1051, %v1050
    %v1053 = vrot.slane %v311, 5
    %v1054 = vsel %vm335, %v1053, %v1052
    %1055 = vrot.lane.b32.xlu0 %v1006, 112
    %v1056 = vpop.permute.xlu0 %1055
    %1057 = vrot.lane.b32.xlu0 %v1020, 112
    %v1058 = vpop.permute.xlu0 %1057
    %1059 = vrot.lane.b32.xlu0 %v1034, 112
    %v1060 = vpop.permute.xlu0 %1059
    %1061 = vrot.lane.b32.xlu0 %v1048, 112
    %v1062 = vpop.permute.xlu0 %1061
    %1063 = vrot.lane.b32.xlu0 %v1054, 112
    %v1064 = vpop.permute.xlu0 %1063
    %vm1070 = vcmask 1032064
    %1071 = vst.msk [vmem:[#allocation2] sm:$0xff] %vm1070, %v1056
    %1072 = vst.msk [vmem:[#allocation2 + $0x20] sm:$0xff] %vm1070, %v1058
    %1073 = vst.msk [vmem:[#allocation2 + $0x40] sm:$0xff] %vm1070, %v1060
    %1074 = vst.msk [vmem:[#allocation2 + $0x60] sm:$0xff] %vm1070, %v1062
    %vm1075 = vcmask 1027968
    %1076 = vst.msk [vmem:[#allocation2 + $0x80] sm:$0xf] %vm1075, %v1064
    %v1077 = vsel %vm329, %v57, %v152
    %v1078 = vrot.slane %v59, 7
    %v1079 = vsel %vm332, %v1078, %v1077
    %v1080 = vrot.slane %v61, 6
    %v1081 = vsel %vm335, %v1080, %v1079
    %v1082 = vrot.slane %v89, 5
    %v1083 = vsel %vm338, %v1082, %v1081
    %v1084 = vrot.slane %v93, 4
    %v1085 = vsel %vm341, %v1084, %v1083
    %v1086 = vrot.slane %v97, 3
    %v1087 = vsel %vm344, %v1086, %v1085
    %v1088 = vrot.slane %v101, 2
    %v1089 = vsel %vm347, %v1088, %v1087
    %v1090 = vrot.slane %v121, 1
    %v1091 = vsel %vm329, %v125, %v1090
    %v1092 = vrot.slane %v129, 7
    %v1093 = vsel %vm332, %v1092, %v1091
    %v1094 = vrot.slane %v133, 6
    %v1095 = vsel %vm335, %v1094, %v1093
    %v1096 = vrot.slane %v152, 5
    %v1097 = vsel %vm338, %v1096, %v1095
    %v1098 = vrot.slane %v155, 4
    %v1099 = vsel %vm341, %v1098, %v1097
    %v1100 = vrot.slane %v158, 3
    %v1101 = vsel %vm344, %v1100, %v1099
    %v1102 = vrot.slane %v161, 2
    %v1103 = vsel %vm347, %v1102, %v1101
    %v1104 = vrot.slane %v178, 1
    %v1105 = vsel %vm329, %v182, %v1104
    %v1106 = vrot.slane %v186, 7
    %v1107 = vsel %vm332, %v1106, %v1105
    %v1108 = vrot.slane %v190, 6
    %v1109 = vsel %vm335, %v1108, %v1107
    %v1110 = vrot.slane %v210, 5
    %v1111 = vsel %vm338, %v1110, %v1109
    %v1112 = vrot.slane %v214, 4
    %v1113 = vsel %vm341, %v1112, %v1111
    %v1114 = vrot.slane %v218, 3
    %v1115 = vsel %vm344, %v1114, %v1113
    %v1116 = vrot.slane %v222, 2
    %v1117 = vsel %vm347, %v1116, %v1115
    %v1118 = vrot.slane %v241, 1
    %v1119 = vsel %vm329, %v244, %v1118
    %v1120 = vrot.slane %v247, 7
    %v1121 = vsel %vm332, %v1120, %v1119
    %v1122 = vrot.slane %v250, 6
    %v1123 = vsel %vm335, %v1122, %v1121
    %v1124 = vrot.slane %v267, 5
    %v1125 = vsel %vm338, %v1124, %v1123
    %v1126 = vrot.slane %v271, 4
    %v1127 = vsel %vm341, %v1126, %v1125
    %v1128 = vrot.slane %v275, 3
    %v1129 = vsel %vm344, %v1128, %v1127
    %v1130 = vrot.slane %v279, 2
    %v1131 = vsel %vm347, %v1130, %v1129
    %v1132 = vrot.slane %v299, 1
    %v1133 = vsel %vm329, %v303, %v1132
    %v1134 = vrot.slane %v307, 7
    %v1135 = vsel %vm332, %v1134, %v1133
    %v1136 = vrot.slane %v311, 6
    %v1137 = vsel %vm335, %v1136, %v1135
    %1138 = vrot.lane.b32.xlu0 %v1089, 126
    %v1139 = vpop.permute.xlu0 %1138
    %1140 = vrot.lane.b32.xlu0 %v1103, 126
    %v1141 = vpop.permute.xlu0 %1140
    %1142 = vrot.lane.b32.xlu0 %v1117, 126
    %v1143 = vpop.permute.xlu0 %1142
    %1144 = vrot.lane.b32.xlu0 %v1131, 126
    %v1145 = vpop.permute.xlu0 %1144
    %1146 = vrot.lane.b32.xlu0 %v1137, 126
    %v1147 = vpop.permute.xlu0 %1146
    %vm1153 = vcmask 1048560
    %1154 = vst.msk [vmem:[#allocation2] sm:$0xff] %vm1153, %v1139
    %vm1155 = vcmask 97280
    %1156 = vst.msk [vmem:[#allocation2 + $0x8] sm:$0xff] %vm1155, %v1139
    %1157 = vst.msk [vmem:[#allocation2 + $0x20] sm:$0xff] %vm1153, %v1141
    %1158 = vst.msk [vmem:[#allocation2 + $0x28] sm:$0xff] %vm1155, %v1141
    %1159 = vst.msk [vmem:[#allocation2 + $0x40] sm:$0xff] %vm1153, %v1143
    %1160 = vst.msk [vmem:[#allocation2 + $0x48] sm:$0xff] %vm1155, %v1143
    %1161 = vst.msk [vmem:[#allocation2 + $0x60] sm:$0xff] %vm1153, %v1145
    %1162 = vst.msk [vmem:[#allocation2 + $0x68] sm:$0xff] %vm1155, %v1145
    %vm1163 = vcmask 1044464
    %1164 = vst.msk [vmem:[#allocation2 + $0x80] sm:$0xf] %vm1163, %v1147
    %vm1165 = vcmask 93184
    %1166 = vst.msk [vmem:[#allocation2 + $0x88] sm:$0xf] %vm1165, %v1147
    %v1167 = vsel %vm329, %v155, %v241
    %v1168 = vsel %vm332, %v59, %v1167
    %v1169 = vrot.slane %v61, 7
    %v1170 = vsel %vm335, %v1169, %v1168
    %v1171 = vrot.slane %v89, 6
    %v1172 = vsel %vm338, %v1171, %v1170
    %v1173 = vrot.slane %v93, 5
    %v1174 = vsel %vm341, %v1173, %v1172
    %v1175 = vrot.slane %v97, 4
    %v1176 = vsel %vm344, %v1175, %v1174
    %v1177 = vrot.slane %v101, 3
    %v1178 = vsel %vm347, %v1177, %v1176
    %v1179 = vrot.slane %v121, 2
    %v1180 = vrot.slane %v125, 1
    %v1181 = vsel %vm329, %v1180, %v1179
    %v1182 = vsel %vm332, %v129, %v1181
    %v1183 = vrot.slane %v133, 7
    %v1184 = vsel %vm335, %v1183, %v1182
    %v1185 = vrot.slane %v152, 6
    %v1186 = vsel %vm338, %v1185, %v1184
    %v1187 = vrot.slane %v155, 5
    %v1188 = vsel %vm341, %v1187, %v1186
    %v1189 = vrot.slane %v158, 4
    %v1190 = vsel %vm344, %v1189, %v1188
    %v1191 = vrot.slane %v161, 3
    %v1192 = vsel %vm347, %v1191, %v1190
    %v1193 = vrot.slane %v178, 2
    %v1194 = vrot.slane %v182, 1
    %v1195 = vsel %vm329, %v1194, %v1193
    %v1196 = vsel %vm332, %v186, %v1195
    %v1197 = vrot.slane %v190, 7
    %v1198 = vsel %vm335, %v1197, %v1196
    %v1199 = vrot.slane %v210, 6
    %v1200 = vsel %vm338, %v1199, %v1198
    %v1201 = vrot.slane %v214, 5
    %v1202 = vsel %vm341, %v1201, %v1200
    %v1203 = vrot.slane %v218, 4
    %v1204 = vsel %vm344, %v1203, %v1202
    %v1205 = vrot.slane %v222, 3
    %v1206 = vsel %vm347, %v1205, %v1204
    %v1207 = vrot.slane %v241, 2
    %v1208 = vrot.slane %v244, 1
    %v1209 = vsel %vm329, %v1208, %v1207
    %v1210 = vsel %vm332, %v247, %v1209
    %v1211 = vrot.slane %v250, 7
    %v1212 = vsel %vm335, %v1211, %v1210
    %v1213 = vrot.slane %v267, 6
    %v1214 = vsel %vm338, %v1213, %v1212
    %v1215 = vrot.slane %v271, 5
    %v1216 = vsel %vm341, %v1215, %v1214
    %v1217 = vrot.slane %v275, 4
    %v1218 = vsel %vm344, %v1217, %v1216
    %v1219 = vrot.slane %v279, 3
    %v1220 = vsel %vm347, %v1219, %v1218
    %v1221 = vrot.slane %v299, 2
    %v1222 = vrot.slane %v303, 1
    %v1223 = vsel %vm329, %v1222, %v1221
    %v1224 = vsel %vm332, %v307, %v1223
    %v1225 = vrot.slane %v311, 7
    %v1226 = vsel %vm335, %v1225, %v1224
    %1227 = vrot.lane.b32.xlu0 %v1178, 12
    %v1228 = vpop.permute.xlu0 %1227
    %1229 = vrot.lane.b32.xlu0 %v1192, 12
    %v1230 = vpop.permute.xlu0 %1229
    %1231 = vrot.lane.b32.xlu0 %v1206, 12
    %v1232 = vpop.permute.xlu0 %1231
    %1233 = vrot.lane.b32.xlu0 %v1220, 12
    %v1234 = vpop.permute.xlu0 %1233
    %1235 = vrot.lane.b32.xlu0 %v1226, 12
    %v1236 = vpop.permute.xlu0 %1235
    %vm1242 = vcmask 212064
    %1243 = vst.msk [vmem:[#allocation2 + $0x8] sm:$0xff] %vm1242, %v1228
    %1244 = vst.msk [vmem:[#allocation2 + $0x28] sm:$0xff] %vm1242, %v1230
    %1245 = vst.msk [vmem:[#allocation2 + $0x48] sm:$0xff] %vm1242, %v1232
    %1246 = vst.msk [vmem:[#allocation2 + $0x68] sm:$0xff] %vm1242, %v1234
    %vm1247 = vcmask 207968
    %1248 = vst.msk [vmem:[#allocation2 + $0x88] sm:$0xf] %vm1247, %v1236
    %v1249 = vrot.slane %v55, 3
    %v1250 = vsel %vm329, %v244, %v1249
    %v1251 = vsel %vm332, %v158, %v1250
    %v1252 = vsel %vm335, %v61, %v1251
    %v1253 = vrot.slane %v89, 7
    %v1254 = vsel %vm338, %v1253, %v1252
    %v1255 = vrot.slane %v93, 6
    %v1256 = vsel %vm341, %v1255, %v1254
    %v1257 = vrot.slane %v97, 5
    %v1258 = vsel %vm344, %v1257, %v1256
    %v1259 = vrot.slane %v101, 4
    %v1260 = vsel %vm347, %v1259, %v1258
    %v1261 = vrot.slane %v121, 3
    %v1262 = vrot.slane %v125, 2
    %v1263 = vsel %vm329, %v1262, %v1261
    %v1264 = vrot.slane %v129, 1
    %v1265 = vsel %vm332, %v1264, %v1263
    %v1266 = vsel %vm335, %v133, %v1265
    %v1267 = vrot.slane %v152, 7
    %v1268 = vsel %vm338, %v1267, %v1266
    %v1269 = vrot.slane %v155, 6
    %v1270 = vsel %vm341, %v1269, %v1268
    %v1271 = vrot.slane %v158, 5
    %v1272 = vsel %vm344, %v1271, %v1270
    %v1273 = vrot.slane %v161, 4
    %v1274 = vsel %vm347, %v1273, %v1272
    %v1275 = vrot.slane %v178, 3
    %v1276 = vrot.slane %v182, 2
    %v1277 = vsel %vm329, %v1276, %v1275
    %v1278 = vrot.slane %v186, 1
    %v1279 = vsel %vm332, %v1278, %v1277
    %v1280 = vsel %vm335, %v190, %v1279
    %v1281 = vrot.slane %v210, 7
    %v1282 = vsel %vm338, %v1281, %v1280
    %v1283 = vrot.slane %v214, 6
    %v1284 = vsel %vm341, %v1283, %v1282
    %v1285 = vrot.slane %v218, 5
    %v1286 = vsel %vm344, %v1285, %v1284
    %v1287 = vrot.slane %v222, 4
    %v1288 = vsel %vm347, %v1287, %v1286
    %v1289 = vrot.slane %v241, 3
    %v1290 = vrot.slane %v244, 2
    %v1291 = vsel %vm329, %v1290, %v1289
    %v1292 = vrot.slane %v247, 1
    %v1293 = vsel %vm332, %v1292, %v1291
    %v1294 = vsel %vm335, %v250, %v1293
    %v1295 = vrot.slane %v267, 7
    %v1296 = vsel %vm338, %v1295, %v1294
    %v1297 = vrot.slane %v271, 6
    %v1298 = vsel %vm341, %v1297, %v1296
    %v1299 = vrot.slane %v275, 5
    %v1300 = vsel %vm344, %v1299, %v1298
    %v1301 = vrot.slane %v279, 4
    %v1302 = vsel %vm347, %v1301, %v1300
    %v1303 = vrot.slane %v299, 3
    %v1304 = vrot.slane %v303, 2
    %v1305 = vsel %vm329, %v1304, %v1303
    %v1306 = vrot.slane %v307, 1
    %v1307 = vsel %vm332, %v1306, %v1305
    %v1308 = vsel %vm335, %v311, %v1307
    %1309 = vrot.lane.b32.xlu0 %v1260, 26
    %v1310 = vpop.permute.xlu0 %1309
    %1311 = vrot.lane.b32.xlu0 %v1274, 26
    %v1312 = vpop.permute.xlu0 %1311
    %1313 = vrot.lane.b32.xlu0 %v1288, 26
    %v1314 = vpop.permute.xlu0 %1313
    %1315 = vrot.lane.b32.xlu0 %v1302, 26
    %v1316 = vpop.permute.xlu0 %1315
    %1317 = vrot.lane.b32.xlu0 %v1308, 26
    %v1318 = vpop.permute.xlu0 %1317
    %vm1324 = vcmask 326864
    %1325 = vst.msk [vmem:[#allocation2 + $0x8] sm:$0xff] %vm1324, %v1310
    %1326 = vst.msk [vmem:[#allocation2 + $0x28] sm:$0xff] %vm1324, %v1312
    %1327 = vst.msk [vmem:[#allocation2 + $0x48] sm:$0xff] %vm1324, %v1314
    %1328 = vst.msk [vmem:[#allocation2 + $0x68] sm:$0xff] %vm1324, %v1316
    %vm1329 = vcmask 322768
    %1330 = vst.msk [vmem:[#allocation2 + $0x88] sm:$0xf] %vm1329, %v1318
    %v1331 = vrot.slane %v55, 4
    %v1332 = vrot.slane %v57, 3
    %v1333 = vsel %vm329, %v1332, %v1331
    %v1334 = vsel %vm332, %v247, %v1333
    %v1335 = vsel %vm335, %v161, %v1334
    %v1336 = vsel %vm338, %v89, %v1335
    %v1337 = vrot.slane %v93, 7
    %v1338 = vsel %vm341, %v1337, %v1336
    %v1339 = vrot.slane %v97, 6
    %v1340 = vsel %vm344, %v1339, %v1338
    %v1341 = vrot.slane %v101, 5
    %v1342 = vsel %vm347, %v1341, %v1340
    %v1343 = vrot.slane %v121, 4
    %v1344 = vrot.slane %v125, 3
    %v1345 = vsel %vm329, %v1344, %v1343
    %v1346 = vrot.slane %v129, 2
    %v1347 = vsel %vm332, %v1346, %v1345
    %v1348 = vrot.slane %v133, 1
    %v1349 = vsel %vm335, %v1348, %v1347
    %v1350 = vsel %vm338, %v152, %v1349
    %v1351 = vrot.slane %v155, 7
    %v1352 = vsel %vm341, %v1351, %v1350
    %v1353 = vrot.slane %v158, 6
    %v1354 = vsel %vm344, %v1353, %v1352
    %v1355 = vrot.slane %v161, 5
    %v1356 = vsel %vm347, %v1355, %v1354
    %v1357 = vrot.slane %v178, 4
    %v1358 = vrot.slane %v182, 3
    %v1359 = vsel %vm329, %v1358, %v1357
    %v1360 = vrot.slane %v186, 2
    %v1361 = vsel %vm332, %v1360, %v1359
    %v1362 = vrot.slane %v190, 1
    %v1363 = vsel %vm335, %v1362, %v1361
    %v1364 = vsel %vm338, %v210, %v1363
    %v1365 = vrot.slane %v214, 7
    %v1366 = vsel %vm341, %v1365, %v1364
    %v1367 = vrot.slane %v218, 6
    %v1368 = vsel %vm344, %v1367, %v1366
    %v1369 = vrot.slane %v222, 5
    %v1370 = vsel %vm347, %v1369, %v1368
    %v1371 = vrot.slane %v241, 4
    %v1372 = vrot.slane %v244, 3
    %v1373 = vsel %vm329, %v1372, %v1371
    %v1374 = vrot.slane %v247, 2
    %v1375 = vsel %vm332, %v1374, %v1373
    %v1376 = vrot.slane %v250, 1
    %v1377 = vsel %vm335, %v1376, %v1375
    %v1378 = vsel %vm338, %v267, %v1377
    %v1379 = vrot.slane %v271, 7
    %v1380 = vsel %vm341, %v1379, %v1378
    %v1381 = vrot.slane %v275, 6
    %v1382 = vsel %vm344, %v1381, %v1380
    %v1383 = vrot.slane %v279, 5
    %v1384 = vsel %vm347, %v1383, %v1382
    %v1385 = vrot.slane %v299, 4
    %v1386 = vrot.slane %v303, 3
    %v1387 = vsel %vm329, %v1386, %v1385
    %v1388 = vrot.slane %v307, 2
    %v1389 = vsel %vm332, %v1388, %v1387
    %v1390 = vrot.slane %v311, 1
    %v1391 = vsel %vm335, %v1390, %v1389
    %1392 = vrot.lane.b32.xlu0 %v1342, 40
    %v1393 = vpop.permute.xlu0 %1392
    %1394 = vrot.lane.b32.xlu0 %v1356, 40
    %v1395 = vpop.permute.xlu0 %1394
    %1396 = vrot.lane.b32.xlu0 %v1370, 40
    %v1397 = vpop.permute.xlu0 %1396
    %1398 = vrot.lane.b32.xlu0 %v1384, 40
    %v1399 = vpop.permute.xlu0 %1398
    %1400 = vrot.lane.b32.xlu0 %v1391, 40
    %v1401 = vpop.permute.xlu0 %1400
    %vm1407 = vcmask 441664
    %1408 = vst.msk [vmem:[#allocation2 + $0x8] sm:$0xff] %vm1407, %v1393
    %1409 = vst.msk [vmem:[#allocation2 + $0x28] sm:$0xff] %vm1407, %v1395
    %1410 = vst.msk [vmem:[#allocation2 + $0x48] sm:$0xff] %vm1407, %v1397
    %1411 = vst.msk [vmem:[#allocation2 + $0x68] sm:$0xff] %vm1407, %v1399
    %vm1412 = vcmask 437568
    %1413 = vst.msk [vmem:[#allocation2 + $0x88] sm:$0xf] %vm1412, %v1401
    %v1414 = vrot.slane %v55, 5
    %v1415 = vrot.slane %v57, 4
    %v1416 = vsel %vm329, %v1415, %v1414
    %v1417 = vrot.slane %v59, 3
    %v1418 = vsel %vm332, %v1417, %v1416
    %v1419 = vsel %vm335, %v250, %v1418
    %v1420 = vrot.slane %v89, 1
    %v1421 = vsel %vm338, %v1420, %v1419
    %v1422 = vsel %vm341, %v93, %v1421
    %v1423 = vrot.slane %v97, 7
    %v1424 = vsel %vm344, %v1423, %v1422
    %v1425 = vrot.slane %v101, 6
    %v1426 = vsel %vm347, %v1425, %v1424
    %v1427 = vrot.slane %v121, 5
    %v1428 = vrot.slane %v125, 4
    %v1429 = vsel %vm329, %v1428, %v1427
    %v1430 = vrot.slane %v129, 3
    %v1431 = vsel %vm332, %v1430, %v1429
    %v1432 = vrot.slane %v133, 2
    %v1433 = vsel %vm335, %v1432, %v1431
    %v1434 = vrot.slane %v152, 1
    %v1435 = vsel %vm338, %v1434, %v1433
    %v1436 = vsel %vm341, %v155, %v1435
    %v1437 = vrot.slane %v158, 7
    %v1438 = vsel %vm344, %v1437, %v1436
    %v1439 = vrot.slane %v161, 6
    %v1440 = vsel %vm347, %v1439, %v1438
    %v1441 = vrot.slane %v178, 5
    %v1442 = vrot.slane %v182, 4
    %v1443 = vsel %vm329, %v1442, %v1441
    %v1444 = vrot.slane %v186, 3
    %v1445 = vsel %vm332, %v1444, %v1443
    %v1446 = vrot.slane %v190, 2
    %v1447 = vsel %vm335, %v1446, %v1445
    %v1448 = vrot.slane %v210, 1
    %v1449 = vsel %vm338, %v1448, %v1447
    %v1450 = vsel %vm341, %v214, %v1449
    %v1451 = vrot.slane %v218, 7
    %v1452 = vsel %vm344, %v1451, %v1450
    %v1453 = vrot.slane %v222, 6
    %v1454 = vsel %vm347, %v1453, %v1452
    %v1455 = vrot.slane %v241, 5
    %v1456 = vrot.slane %v244, 4
    %v1457 = vsel %vm329, %v1456, %v1455
    %v1458 = vrot.slane %v247, 3
    %v1459 = vsel %vm332, %v1458, %v1457
    %v1460 = vrot.slane %v250, 2
    %v1461 = vsel %vm335, %v1460, %v1459
    %v1462 = vrot.slane %v267, 1
    %v1463 = vsel %vm338, %v1462, %v1461
    %v1464 = vsel %vm341, %v271, %v1463
    %v1465 = vrot.slane %v275, 7
    %v1466 = vsel %vm344, %v1465, %v1464
    %v1467 = vrot.slane %v279, 6
    %v1468 = vsel %vm347, %v1467, %v1466
    %v1469 = vrot.slane %v299, 5
    %v1470 = vrot.slane %v303, 4
    %v1471 = vsel %vm329, %v1470, %v1469
    %v1472 = vrot.slane %v307, 3
    %v1473 = vsel %vm332, %v1472, %v1471
    %v1474 = vrot.slane %v311, 2
    %v1475 = vsel %vm335, %v1474, %v1473
    %1476 = vrot.lane.b32.xlu0 %v1426, 54
    %v1477 = vpop.permute.xlu0 %1476
    %1478 = vrot.lane.b32.xlu0 %v1440, 54
    %v1479 = vpop.permute.xlu0 %1478
    %1480 = vrot.lane.b32.xlu0 %v1454, 54
    %v1481 = vpop.permute.xlu0 %1480
    %1482 = vrot.lane.b32.xlu0 %v1468, 54
    %v1483 = vpop.permute.xlu0 %1482
    %1484 = vrot.lane.b32.xlu0 %v1475, 54
    %v1485 = vpop.permute.xlu0 %1484
    %vm1491 = vcmask 556464
    %1492 = vst.msk [vmem:[#allocation2 + $0x8] sm:$0xff] %vm1491, %v1477
    %1493 = vst.msk [vmem:[#allocation2 + $0x28] sm:$0xff] %vm1491, %v1479
    %1494 = vst.msk [vmem:[#allocation2 + $0x48] sm:$0xff] %vm1491, %v1481
    %1495 = vst.msk [vmem:[#allocation2 + $0x68] sm:$0xff] %vm1491, %v1483
    %vm1496 = vcmask 552368
    %1497 = vst.msk [vmem:[#allocation2 + $0x88] sm:$0xf] %vm1496, %v1485
    %v1498 = vrot.slane %v64, 7
    %v1499 = vsel %vm329, %v1498, %v62
    %v1500 = vrot.slane %v66, 6
    %v1501 = vsel %vm332, %v1500, %v1499
    %v1502 = vrot.slane %v68, 5
    %v1503 = vsel %vm335, %v1502, %v1501
    %v1504 = vrot.slane %v103, 4
    %v1505 = vsel %vm338, %v1504, %v1503
    %v1506 = vrot.slane %v107, 3
    %v1507 = vsel %vm341, %v1506, %v1505
    %v1508 = vrot.slane %v111, 2
    %v1509 = vsel %vm344, %v1508, %v1507
    %v1510 = vrot.slane %v115, 1
    %v1511 = vsel %vm347, %v1510, %v1509
    %v1512 = vrot.slane %v139, 7
    %v1513 = vsel %vm329, %v1512, %v135
    %v1514 = vrot.slane %v143, 6
    %v1515 = vsel %vm332, %v1514, %v1513
    %v1516 = vrot.slane %v147, 5
    %v1517 = vsel %vm335, %v1516, %v1515
    %v1518 = vrot.slane %v165, 4
    %v1519 = vsel %vm338, %v1518, %v1517
    %v1520 = vrot.slane %v168, 3
    %v1521 = vsel %vm341, %v1520, %v1519
    %v1522 = vrot.slane %v171, 2
    %v1523 = vsel %vm344, %v1522, %v1521
    %v1524 = vrot.slane %v174, 1
    %v1525 = vsel %vm347, %v1524, %v1523
    %v1526 = vrot.slane %v196, 7
    %v1527 = vsel %vm329, %v1526, %v192
    %v1528 = vrot.slane %v200, 6
    %v1529 = vsel %vm332, %v1528, %v1527
    %v1530 = vrot.slane %v204, 5
    %v1531 = vsel %vm335, %v1530, %v1529
    %v1532 = vrot.slane %v224, 4
    %v1533 = vsel %vm338, %v1532, %v1531
    %v1534 = vrot.slane %v228, 3
    %v1535 = vsel %vm341, %v1534, %v1533
    %v1536 = vrot.slane %v232, 2
    %v1537 = vsel %vm344, %v1536, %v1535
    %v1538 = vrot.slane %v236, 1
    %v1539 = vsel %vm347, %v1538, %v1537
    %v1540 = vrot.slane %v257, 7
    %v1541 = vsel %vm329, %v1540, %v254
    %v1542 = vrot.slane %v260, 6
    %v1543 = vsel %vm332, %v1542, %v1541
    %v1544 = vrot.slane %v263, 5
    %v1545 = vsel %vm335, %v1544, %v1543
    %v1546 = vrot.slane %v281, 4
    %v1547 = vsel %vm338, %v1546, %v1545
    %v1548 = vrot.slane %v285, 3
    %v1549 = vsel %vm341, %v1548, %v1547
    %v1550 = vrot.slane %v289, 2
    %v1551 = vsel %vm344, %v1550, %v1549
    %v1552 = vrot.slane %v293, 1
    %v1553 = vsel %vm347, %v1552, %v1551
    %v1554 = vrot.slane %v317, 7
    %v1555 = vsel %vm329, %v1554, %v313
    %v1556 = vrot.slane %v321, 6
    %v1557 = vsel %vm332, %v1556, %v1555
    %v1558 = vrot.slane %v325, 5
    %v1559 = vsel %vm335, %v1558, %v1557
    %1565 = vst.msk [vmem:[#allocation2 + $0x10] sm:$0xff] %vm402, %v1511
    %1566 = vst.msk [vmem:[#allocation2 + $0x30] sm:$0xff] %vm402, %v1525
    %1567 = vst.msk [vmem:[#allocation2 + $0x50] sm:$0xff] %vm402, %v1539
    %1568 = vst.msk [vmem:[#allocation2 + $0x70] sm:$0xff] %vm402, %v1553
    %1569 = vst.msk [vmem:[#allocation2 + $0x90] sm:$0xf] %vm407, %v1559
    %v1570 = vsel %vm329, %v64, %v163
    %v1571 = vrot.slane %v66, 7
    %v1572 = vsel %vm332, %v1571, %v1570
    %v1573 = vrot.slane %v68, 6
    %v1574 = vsel %vm335, %v1573, %v1572
    %v1575 = vrot.slane %v103, 5
    %v1576 = vsel %vm338, %v1575, %v1574
    %v1577 = vrot.slane %v107, 4
    %v1578 = vsel %vm341, %v1577, %v1576
    %v1579 = vrot.slane %v111, 3
    %v1580 = vsel %vm344, %v1579, %v1578
    %v1581 = vrot.slane %v115, 2
    %v1582 = vsel %vm347, %v1581, %v1580
    %v1583 = vrot.slane %v135, 1
    %v1584 = vsel %vm329, %v139, %v1583
    %v1585 = vrot.slane %v143, 7
    %v1586 = vsel %vm332, %v1585, %v1584
    %v1587 = vrot.slane %v147, 6
    %v1588 = vsel %vm335, %v1587, %v1586
    %v1589 = vrot.slane %v165, 5
    %v1590 = vsel %vm338, %v1589, %v1588
    %v1591 = vrot.slane %v168, 4
    %v1592 = vsel %vm341, %v1591, %v1590
    %v1593 = vrot.slane %v171, 3
    %v1594 = vsel %vm344, %v1593, %v1592
    %v1595 = vrot.slane %v174, 2
    %v1596 = vsel %vm347, %v1595, %v1594
    %v1597 = vrot.slane %v192, 1
    %v1598 = vsel %vm329, %v196, %v1597
    %v1599 = vrot.slane %v200, 7
    %v1600 = vsel %vm332, %v1599, %v1598
    %v1601 = vrot.slane %v204, 6
    %v1602 = vsel %vm335, %v1601, %v1600
    %v1603 = vrot.slane %v224, 5
    %v1604 = vsel %vm338, %v1603, %v1602
    %v1605 = vrot.slane %v228, 4
    %v1606 = vsel %vm341, %v1605, %v1604
    %v1607 = vrot.slane %v232, 3
    %v1608 = vsel %vm344, %v1607, %v1606
    %v1609 = vrot.slane %v236, 2
    %v1610 = vsel %vm347, %v1609, %v1608
    %v1611 = vrot.slane %v254, 1
    %v1612 = vsel %vm329, %v257, %v1611
    %v1613 = vrot.slane %v260, 7
    %v1614 = vsel %vm332, %v1613, %v1612
    %v1615 = vrot.slane %v263, 6
    %v1616 = vsel %vm335, %v1615, %v1614
    %v1617 = vrot.slane %v281, 5
    %v1618 = vsel %vm338, %v1617, %v1616
    %v1619 = vrot.slane %v285, 4
    %v1620 = vsel %vm341, %v1619, %v1618
    %v1621 = vrot.slane %v289, 3
    %v1622 = vsel %vm344, %v1621, %v1620
    %v1623 = vrot.slane %v293, 2
    %v1624 = vsel %vm347, %v1623, %v1622
    %v1625 = vrot.slane %v313, 1
    %v1626 = vsel %vm329, %v317, %v1625
    %v1627 = vrot.slane %v321, 7
    %v1628 = vsel %vm332, %v1627, %v1626
    %v1629 = vrot.slane %v325, 6
    %v1630 = vsel %vm335, %v1629, %v1628
    %1631 = vrot.lane.b32.xlu0 %v1582, 14
    %v1632 = vpop.permute.xlu0 %1631
    %1633 = vrot.lane.b32.xlu0 %v1596, 14
    %v1634 = vpop.permute.xlu0 %1633
    %1635 = vrot.lane.b32.xlu0 %v1610, 14
    %v1636 = vpop.permute.xlu0 %1635
    %1637 = vrot.lane.b32.xlu0 %v1624, 14
    %v1638 = vpop.permute.xlu0 %1637
    %1639 = vrot.lane.b32.xlu0 %v1630, 14
    %v1640 = vpop.permute.xlu0 %1639
    %1646 = vst.msk [vmem:[#allocation2 + $0x10] sm:$0xff] %vm485, %v1632
    %1647 = vst.msk [vmem:[#allocation2 + $0x30] sm:$0xff] %vm485, %v1634
    %1648 = vst.msk [vmem:[#allocation2 + $0x50] sm:$0xff] %vm485, %v1636
    %1649 = vst.msk [vmem:[#allocation2 + $0x70] sm:$0xff] %vm485, %v1638
    %1650 = vst.msk [vmem:[#allocation2 + $0x90] sm:$0xf] %vm490, %v1640
    %v1651 = vsel %vm329, %v166, %v252
    %v1652 = vsel %vm332, %v66, %v1651
    %v1653 = vrot.slane %v68, 7
    %v1654 = vsel %vm335, %v1653, %v1652
    %v1655 = vrot.slane %v103, 6
    %v1656 = vsel %vm338, %v1655, %v1654
    %v1657 = vrot.slane %v107, 5
    %v1658 = vsel %vm341, %v1657, %v1656
    %v1659 = vrot.slane %v111, 4
    %v1660 = vsel %vm344, %v1659, %v1658
    %v1661 = vrot.slane %v115, 3
    %v1662 = vsel %vm347, %v1661, %v1660
    %v1663 = vrot.slane %v135, 2
    %v1664 = vrot.slane %v139, 1
    %v1665 = vsel %vm329, %v1664, %v1663
    %v1666 = vsel %vm332, %v143, %v1665
    %v1667 = vrot.slane %v147, 7
    %v1668 = vsel %vm335, %v1667, %v1666
    %v1669 = vrot.slane %v165, 6
    %v1670 = vsel %vm338, %v1669, %v1668
    %v1671 = vrot.slane %v168, 5
    %v1672 = vsel %vm341, %v1671, %v1670
    %v1673 = vrot.slane %v171, 4
    %v1674 = vsel %vm344, %v1673, %v1672
    %v1675 = vrot.slane %v174, 3
    %v1676 = vsel %vm347, %v1675, %v1674
    %v1677 = vrot.slane %v192, 2
    %v1678 = vrot.slane %v196, 1
    %v1679 = vsel %vm329, %v1678, %v1677
    %v1680 = vsel %vm332, %v200, %v1679
    %v1681 = vrot.slane %v204, 7
    %v1682 = vsel %vm335, %v1681, %v1680
    %v1683 = vrot.slane %v224, 6
    %v1684 = vsel %vm338, %v1683, %v1682
    %v1685 = vrot.slane %v228, 5
    %v1686 = vsel %vm341, %v1685, %v1684
    %v1687 = vrot.slane %v232, 4
    %v1688 = vsel %vm344, %v1687, %v1686
    %v1689 = vrot.slane %v236, 3
    %v1690 = vsel %vm347, %v1689, %v1688
    %v1691 = vrot.slane %v254, 2
    %v1692 = vrot.slane %v257, 1
    %v1693 = vsel %vm329, %v1692, %v1691
    %v1694 = vsel %vm332, %v260, %v1693
    %v1695 = vrot.slane %v263, 7
    %v1696 = vsel %vm335, %v1695, %v1694
    %v1697 = vrot.slane %v281, 6
    %v1698 = vsel %vm338, %v1697, %v1696
    %v1699 = vrot.slane %v285, 5
    %v1700 = vsel %vm341, %v1699, %v1698
    %v1701 = vrot.slane %v289, 4
    %v1702 = vsel %vm344, %v1701, %v1700
    %v1703 = vrot.slane %v293, 3
    %v1704 = vsel %vm347, %v1703, %v1702
    %v1705 = vrot.slane %v313, 2
    %v1706 = vrot.slane %v317, 1
    %v1707 = vsel %vm329, %v1706, %v1705
    %v1708 = vsel %vm332, %v321, %v1707
    %v1709 = vrot.slane %v325, 7
    %v1710 = vsel %vm335, %v1709, %v1708
    %1711 = vrot.lane.b32.xlu0 %v1662, 28
    %v1712 = vpop.permute.xlu0 %1711
    %1713 = vrot.lane.b32.xlu0 %v1676, 28
    %v1714 = vpop.permute.xlu0 %1713
    %1715 = vrot.lane.b32.xlu0 %v1690, 28
    %v1716 = vpop.permute.xlu0 %1715
    %1717 = vrot.lane.b32.xlu0 %v1704, 28
    %v1718 = vpop.permute.xlu0 %1717
    %1719 = vrot.lane.b32.xlu0 %v1710, 28
    %v1720 = vpop.permute.xlu0 %1719
    %1726 = vst.msk [vmem:[#allocation2 + $0x10] sm:$0xff] %vm567, %v1712
    %1727 = vst.msk [vmem:[#allocation2 + $0x30] sm:$0xff] %vm567, %v1714
    %1728 = vst.msk [vmem:[#allocation2 + $0x50] sm:$0xff] %vm567, %v1716
    %1729 = vst.msk [vmem:[#allocation2 + $0x70] sm:$0xff] %vm567, %v1718
    %1730 = vst.msk [vmem:[#allocation2 + $0x90] sm:$0xf] %vm572, %v1720
    %v1731 = vrot.slane %v62, 3
    %v1732 = vsel %vm329, %v255, %v1731
    %v1733 = vsel %vm332, %v169, %v1732
    %v1734 = vsel %vm335, %v68, %v1733
    %v1735 = vrot.slane %v103, 7
    %v1736 = vsel %vm338, %v1735, %v1734
    %v1737 = vrot.slane %v107, 6
    %v1738 = vsel %vm341, %v1737, %v1736
    %v1739 = vrot.slane %v111, 5
    %v1740 = vsel %vm344, %v1739, %v1738
    %v1741 = vrot.slane %v115, 4
    %v1742 = vsel %vm347, %v1741, %v1740
    %v1743 = vrot.slane %v135, 3
    %v1744 = vrot.slane %v139, 2
    %v1745 = vsel %vm329, %v1744, %v1743
    %v1746 = vrot.slane %v143, 1
    %v1747 = vsel %vm332, %v1746, %v1745
    %v1748 = vsel %vm335, %v147, %v1747
    %v1749 = vrot.slane %v165, 7
    %v1750 = vsel %vm338, %v1749, %v1748
    %v1751 = vrot.slane %v168, 6
    %v1752 = vsel %vm341, %v1751, %v1750
    %v1753 = vrot.slane %v171, 5
    %v1754 = vsel %vm344, %v1753, %v1752
    %v1755 = vrot.slane %v174, 4
    %v1756 = vsel %vm347, %v1755, %v1754
    %v1757 = vrot.slane %v192, 3
    %v1758 = vrot.slane %v196, 2
    %v1759 = vsel %vm329, %v1758, %v1757
    %v1760 = vrot.slane %v200, 1
    %v1761 = vsel %vm332, %v1760, %v1759
    %v1762 = vsel %vm335, %v204, %v1761
    %v1763 = vrot.slane %v224, 7
    %v1764 = vsel %vm338, %v1763, %v1762
    %v1765 = vrot.slane %v228, 6
    %v1766 = vsel %vm341, %v1765, %v1764
    %v1767 = vrot.slane %v232, 5
    %v1768 = vsel %vm344, %v1767, %v1766
    %v1769 = vrot.slane %v236, 4
    %v1770 = vsel %vm347, %v1769, %v1768
    %v1771 = vrot.slane %v254, 3
    %v1772 = vrot.slane %v257, 2
    %v1773 = vsel %vm329, %v1772, %v1771
    %v1774 = vrot.slane %v260, 1
    %v1775 = vsel %vm332, %v1774, %v1773
    %v1776 = vsel %vm335, %v263, %v1775
    %v1777 = vrot.slane %v281, 7
    %v1778 = vsel %vm338, %v1777, %v1776
    %v1779 = vrot.slane %v285, 6
    %v1780 = vsel %vm341, %v1779, %v1778
    %v1781 = vrot.slane %v289, 5
    %v1782 = vsel %vm344, %v1781, %v1780
    %v1783 = vrot.slane %v293, 4
    %v1784 = vsel %vm347, %v1783, %v1782
    %v1785 = vrot.slane %v313, 3
    %v1786 = vrot.slane %v317, 2
    %v1787 = vsel %vm329, %v1786, %v1785
    %v1788 = vrot.slane %v321, 1
    %v1789 = vsel %vm332, %v1788, %v1787
    %v1790 = vsel %vm335, %v325, %v1789
    %1791 = vrot.lane.b32.xlu0 %v1742, 42
    %v1792 = vpop.permute.xlu0 %1791
    %1793 = vrot.lane.b32.xlu0 %v1756, 42
    %v1794 = vpop.permute.xlu0 %1793
    %1795 = vrot.lane.b32.xlu0 %v1770, 42
    %v1796 = vpop.permute.xlu0 %1795
    %1797 = vrot.lane.b32.xlu0 %v1784, 42
    %v1798 = vpop.permute.xlu0 %1797
    %1799 = vrot.lane.b32.xlu0 %v1790, 42
    %v1800 = vpop.permute.xlu0 %1799
    %1806 = vst.msk [vmem:[#allocation2 + $0x10] sm:$0xff] %vm649, %v1792
    %1807 = vst.msk [vmem:[#allocation2 + $0x30] sm:$0xff] %vm649, %v1794
    %1808 = vst.msk [vmem:[#allocation2 + $0x50] sm:$0xff] %vm649, %v1796
    %1809 = vst.msk [vmem:[#allocation2 + $0x70] sm:$0xff] %vm649, %v1798
    %1810 = vst.msk [vmem:[#allocation2 + $0x90] sm:$0xf] %vm654, %v1800
    %v1811 = vrot.slane %v62, 4
    %v1812 = vrot.slane %v64, 3
    %v1813 = vsel %vm329, %v1812, %v1811
    %v1814 = vsel %vm332, %v258, %v1813
    %v1815 = vsel %vm335, %v172, %v1814
    %v1816 = vsel %vm338, %v103, %v1815
    %v1817 = vrot.slane %v107, 7
    %v1818 = vsel %vm341, %v1817, %v1816
    %v1819 = vrot.slane %v111, 6
    %v1820 = vsel %vm344, %v1819, %v1818
    %v1821 = vrot.slane %v115, 5
    %v1822 = vsel %vm347, %v1821, %v1820
    %v1823 = vrot.slane %v135, 4
    %v1824 = vrot.slane %v139, 3
    %v1825 = vsel %vm329, %v1824, %v1823
    %v1826 = vrot.slane %v143, 2
    %v1827 = vsel %vm332, %v1826, %v1825
    %v1828 = vrot.slane %v147, 1
    %v1829 = vsel %vm335, %v1828, %v1827
    %v1830 = vsel %vm338, %v165, %v1829
    %v1831 = vrot.slane %v168, 7
    %v1832 = vsel %vm341, %v1831, %v1830
    %v1833 = vrot.slane %v171, 6
    %v1834 = vsel %vm344, %v1833, %v1832
    %v1835 = vrot.slane %v174, 5
    %v1836 = vsel %vm347, %v1835, %v1834
    %v1837 = vrot.slane %v192, 4
    %v1838 = vrot.slane %v196, 3
    %v1839 = vsel %vm329, %v1838, %v1837
    %v1840 = vrot.slane %v200, 2
    %v1841 = vsel %vm332, %v1840, %v1839
    %v1842 = vrot.slane %v204, 1
    %v1843 = vsel %vm335, %v1842, %v1841
    %v1844 = vsel %vm338, %v224, %v1843
    %v1845 = vrot.slane %v228, 7
    %v1846 = vsel %vm341, %v1845, %v1844
    %v1847 = vrot.slane %v232, 6
    %v1848 = vsel %vm344, %v1847, %v1846
    %v1849 = vrot.slane %v236, 5
    %v1850 = vsel %vm347, %v1849, %v1848
    %v1851 = vrot.slane %v254, 4
    %v1852 = vrot.slane %v257, 3
    %v1853 = vsel %vm329, %v1852, %v1851
    %v1854 = vrot.slane %v260, 2
    %v1855 = vsel %vm332, %v1854, %v1853
    %v1856 = vrot.slane %v263, 1
    %v1857 = vsel %vm335, %v1856, %v1855
    %v1858 = vsel %vm338, %v281, %v1857
    %v1859 = vrot.slane %v285, 7
    %v1860 = vsel %vm341, %v1859, %v1858
    %v1861 = vrot.slane %v289, 6
    %v1862 = vsel %vm344, %v1861, %v1860
    %v1863 = vrot.slane %v293, 5
    %v1864 = vsel %vm347, %v1863, %v1862
    %v1865 = vrot.slane %v313, 4
    %v1866 = vrot.slane %v317, 3
    %v1867 = vsel %vm329, %v1866, %v1865
    %v1868 = vrot.slane %v321, 2
    %v1869 = vsel %vm332, %v1868, %v1867
    %v1870 = vrot.slane %v325, 1
    %v1871 = vsel %vm335, %v1870, %v1869
    %1872 = vrot.lane.b32.xlu0 %v1822, 56
    %v1873 = vpop.permute.xlu0 %1872
    %1874 = vrot.lane.b32.xlu0 %v1836, 56
    %v1875 = vpop.permute.xlu0 %1874
    %1876 = vrot.lane.b32.xlu0 %v1850, 56
    %v1877 = vpop.permute.xlu0 %1876
    %1878 = vrot.lane.b32.xlu0 %v1864, 56
    %v1879 = vpop.permute.xlu0 %1878
    %1880 = vrot.lane.b32.xlu0 %v1871, 56
    %v1881 = vpop.permute.xlu0 %1880
    %1887 = vst.msk [vmem:[#allocation2 + $0x10] sm:$0xff] %vm732, %v1873
    %1888 = vst.msk [vmem:[#allocation2 + $0x30] sm:$0xff] %vm732, %v1875
    %1889 = vst.msk [vmem:[#allocation2 + $0x50] sm:$0xff] %vm732, %v1877
    %1890 = vst.msk [vmem:[#allocation2 + $0x70] sm:$0xff] %vm732, %v1879
    %1891 = vst.msk [vmem:[#allocation2 + $0x90] sm:$0xf] %vm737, %v1881
    %v1892 = vrot.slane %v62, 5
    %v1893 = vrot.slane %v64, 4
    %v1894 = vsel %vm329, %v1893, %v1892
    %v1895 = vrot.slane %v66, 3
    %v1896 = vsel %vm332, %v1895, %v1894
    %v1897 = vsel %vm335, %v261, %v1896
    %v1898 = vrot.slane %v103, 1
    %v1899 = vsel %vm338, %v1898, %v1897
    %v1900 = vsel %vm341, %v107, %v1899
    %v1901 = vrot.slane %v111, 7
    %v1902 = vsel %vm344, %v1901, %v1900
    %v1903 = vrot.slane %v115, 6
    %v1904 = vsel %vm347, %v1903, %v1902
    %v1905 = vrot.slane %v135, 5
    %v1906 = vrot.slane %v139, 4
    %v1907 = vsel %vm329, %v1906, %v1905
    %v1908 = vrot.slane %v143, 3
    %v1909 = vsel %vm332, %v1908, %v1907
    %v1910 = vrot.slane %v147, 2
    %v1911 = vsel %vm335, %v1910, %v1909
    %v1912 = vrot.slane %v165, 1
    %v1913 = vsel %vm338, %v1912, %v1911
    %v1914 = vsel %vm341, %v168, %v1913
    %v1915 = vrot.slane %v171, 7
    %v1916 = vsel %vm344, %v1915, %v1914
    %v1917 = vrot.slane %v174, 6
    %v1918 = vsel %vm347, %v1917, %v1916
    %v1919 = vrot.slane %v192, 5
    %v1920 = vrot.slane %v196, 4
    %v1921 = vsel %vm329, %v1920, %v1919
    %v1922 = vrot.slane %v200, 3
    %v1923 = vsel %vm332, %v1922, %v1921
    %v1924 = vrot.slane %v204, 2
    %v1925 = vsel %vm335, %v1924, %v1923
    %v1926 = vrot.slane %v224, 1
    %v1927 = vsel %vm338, %v1926, %v1925
    %v1928 = vsel %vm341, %v228, %v1927
    %v1929 = vrot.slane %v232, 7
    %v1930 = vsel %vm344, %v1929, %v1928
    %v1931 = vrot.slane %v236, 6
    %v1932 = vsel %vm347, %v1931, %v1930
    %v1933 = vrot.slane %v254, 5
    %v1934 = vrot.slane %v257, 4
    %v1935 = vsel %vm329, %v1934, %v1933
    %v1936 = vrot.slane %v260, 3
    %v1937 = vsel %vm332, %v1936, %v1935
    %v1938 = vrot.slane %v263, 2
    %v1939 = vsel %vm335, %v1938, %v1937
    %v1940 = vrot.slane %v281, 1
    %v1941 = vsel %vm338, %v1940, %v1939
    %v1942 = vsel %vm341, %v285, %v1941
    %v1943 = vrot.slane %v289, 7
    %v1944 = vsel %vm344, %v1943, %v1942
    %v1945 = vrot.slane %v293, 6
    %v1946 = vsel %vm347, %v1945, %v1944
    %v1947 = vrot.slane %v313, 5
    %v1948 = vrot.slane %v317, 4
    %v1949 = vsel %vm329, %v1948, %v1947
    %v1950 = vrot.slane %v321, 3
    %v1951 = vsel %vm332, %v1950, %v1949
    %v1952 = vrot.slane %v325, 2
    %v1953 = vsel %vm335, %v1952, %v1951
    %1954 = vrot.lane.b32.xlu0 %v1904, 70
    %v1955 = vpop.permute.xlu0 %1954
    %1956 = vrot.lane.b32.xlu0 %v1918, 70
    %v1957 = vpop.permute.xlu0 %1956
    %1958 = vrot.lane.b32.xlu0 %v1932, 70
    %v1959 = vpop.permute.xlu0 %1958
    %1960 = vrot.lane.b32.xlu0 %v1946, 70
    %v1961 = vpop.permute.xlu0 %1960
    %1962 = vrot.lane.b32.xlu0 %v1953, 70
    %v1963 = vpop.permute.xlu0 %1962
    %1969 = vst.msk [vmem:[#allocation2 + $0x10] sm:$0xff] %vm816, %v1955
    %1970 = vst.msk [vmem:[#allocation2 + $0x30] sm:$0xff] %vm816, %v1957
    %1971 = vst.msk [vmem:[#allocation2 + $0x50] sm:$0xff] %vm816, %v1959
    %1972 = vst.msk [vmem:[#allocation2 + $0x70] sm:$0xff] %vm816, %v1961
    %1973 = vst.msk [vmem:[#allocation2 + $0x90] sm:$0xf] %vm821, %v1963
    %v1974 = vrot.slane %v62, 6
    %v1975 = vrot.slane %v64, 5
    %v1976 = vsel %vm329, %v1975, %v1974
    %v1977 = vrot.slane %v66, 4
    %v1978 = vsel %vm332, %v1977, %v1976
    %v1979 = vrot.slane %v68, 3
    %v1980 = vsel %vm335, %v1979, %v1978
    %v1981 = vrot.slane %v103, 2
    %v1982 = vsel %vm338, %v1981, %v1980
    %v1983 = vrot.slane %v107, 1
    %v1984 = vsel %vm341, %v1983, %v1982
    %v1985 = vsel %vm344, %v111, %v1984
    %v1986 = vrot.slane %v115, 7
    %v1987 = vsel %vm347, %v1986, %v1985
    %v1988 = vrot.slane %v135, 6
    %v1989 = vrot.slane %v139, 5
    %v1990 = vsel %vm329, %v1989, %v1988
    %v1991 = vrot.slane %v143, 4
    %v1992 = vsel %vm332, %v1991, %v1990
    %v1993 = vrot.slane %v147, 3
    %v1994 = vsel %vm335, %v1993, %v1992
    %v1995 = vrot.slane %v165, 2
    %v1996 = vsel %vm338, %v1995, %v1994
    %v1997 = vrot.slane %v168, 1
    %v1998 = vsel %vm341, %v1997, %v1996
    %v1999 = vsel %vm344, %v171, %v1998
    %v2000 = vrot.slane %v174, 7
    %v2001 = vsel %vm347, %v2000, %v1999
    %v2002 = vrot.slane %v192, 6
    %v2003 = vrot.slane %v196, 5
    %v2004 = vsel %vm329, %v2003, %v2002
    %v2005 = vrot.slane %v200, 4
    %v2006 = vsel %vm332, %v2005, %v2004
    %v2007 = vrot.slane %v204, 3
    %v2008 = vsel %vm335, %v2007, %v2006
    %v2009 = vrot.slane %v224, 2
    %v2010 = vsel %vm338, %v2009, %v2008
    %v2011 = vrot.slane %v228, 1
    %v2012 = vsel %vm341, %v2011, %v2010
    %v2013 = vsel %vm344, %v232, %v2012
    %v2014 = vrot.slane %v236, 7
    %v2015 = vsel %vm347, %v2014, %v2013
    %v2016 = vrot.slane %v254, 6
    %v2017 = vrot.slane %v257, 5
    %v2018 = vsel %vm329, %v2017, %v2016
    %v2019 = vrot.slane %v260, 4
    %v2020 = vsel %vm332, %v2019, %v2018
    %v2021 = vrot.slane %v263, 3
    %v2022 = vsel %vm335, %v2021, %v2020
    %v2023 = vrot.slane %v281, 2
    %v2024 = vsel %vm338, %v2023, %v2022
    %v2025 = vrot.slane %v285, 1
    %v2026 = vsel %vm341, %v2025, %v2024
    %v2027 = vsel %vm344, %v289, %v2026
    %v2028 = vrot.slane %v293, 7
    %v2029 = vsel %vm347, %v2028, %v2027
    %v2030 = vrot.slane %v313, 6
    %v2031 = vrot.slane %v317, 5
    %v2032 = vsel %vm329, %v2031, %v2030
    %v2033 = vrot.slane %v321, 4
    %v2034 = vsel %vm332, %v2033, %v2032
    %v2035 = vrot.slane %v325, 3
    %v2036 = vsel %vm335, %v2035, %v2034
    %2037 = vrot.lane.b32.xlu0 %v1987, 84
    %v2038 = vpop.permute.xlu0 %2037
    %2039 = vrot.lane.b32.xlu0 %v2001, 84
    %v2040 = vpop.permute.xlu0 %2039
    %2041 = vrot.lane.b32.xlu0 %v2015, 84
    %v2042 = vpop.permute.xlu0 %2041
    %2043 = vrot.lane.b32.xlu0 %v2029, 84
    %v2044 = vpop.permute.xlu0 %2043
    %2045 = vrot.lane.b32.xlu0 %v2036, 84
    %v2046 = vpop.permute.xlu0 %2045
    %2052 = vst.msk [vmem:[#allocation2 + $0x10] sm:$0xff] %vm901, %v2038
    %2053 = vst.msk [vmem:[#allocation2 + $0x30] sm:$0xff] %vm901, %v2040
    %2054 = vst.msk [vmem:[#allocation2 + $0x50] sm:$0xff] %vm901, %v2042
    %2055 = vst.msk [vmem:[#allocation2 + $0x70] sm:$0xff] %vm901, %v2044
    %2056 = vst.msk [vmem:[#allocation2 + $0x90] sm:$0xf] %vm906, %v2046
    %v2057 = vrot.slane %v62, 7
    %v2058 = vrot.slane %v64, 6
    %v2059 = vsel %vm329, %v2058, %v2057
    %v2060 = vrot.slane %v66, 5
    %v2061 = vsel %vm332, %v2060, %v2059
    %v2062 = vrot.slane %v68, 4
    %v2063 = vsel %vm335, %v2062, %v2061
    %v2064 = vrot.slane %v103, 3
    %v2065 = vsel %vm338, %v2064, %v2063
    %v2066 = vrot.slane %v107, 2
    %v2067 = vsel %vm341, %v2066, %v2065
    %v2068 = vrot.slane %v111, 1
    %v2069 = vsel %vm344, %v2068, %v2067
    %v2070 = vsel %vm347, %v115, %v2069
    %v2071 = vrot.slane %v135, 7
    %v2072 = vrot.slane %v139, 6
    %v2073 = vsel %vm329, %v2072, %v2071
    %v2074 = vrot.slane %v143, 5
    %v2075 = vsel %vm332, %v2074, %v2073
    %v2076 = vrot.slane %v147, 4
    %v2077 = vsel %vm335, %v2076, %v2075
    %v2078 = vrot.slane %v165, 3
    %v2079 = vsel %vm338, %v2078, %v2077
    %v2080 = vrot.slane %v168, 2
    %v2081 = vsel %vm341, %v2080, %v2079
    %v2082 = vrot.slane %v171, 1
    %v2083 = vsel %vm344, %v2082, %v2081
    %v2084 = vsel %vm347, %v174, %v2083
    %v2085 = vrot.slane %v192, 7
    %v2086 = vrot.slane %v196, 6
    %v2087 = vsel %vm329, %v2086, %v2085
    %v2088 = vrot.slane %v200, 5
    %v2089 = vsel %vm332, %v2088, %v2087
    %v2090 = vrot.slane %v204, 4
    %v2091 = vsel %vm335, %v2090, %v2089
    %v2092 = vrot.slane %v224, 3
    %v2093 = vsel %vm338, %v2092, %v2091
    %v2094 = vrot.slane %v228, 2
    %v2095 = vsel %vm341, %v2094, %v2093
    %v2096 = vrot.slane %v232, 1
    %v2097 = vsel %vm344, %v2096, %v2095
    %v2098 = vsel %vm347, %v236, %v2097
    %v2099 = vrot.slane %v254, 7
    %v2100 = vrot.slane %v257, 6
    %v2101 = vsel %vm329, %v2100, %v2099
    %v2102 = vrot.slane %v260, 5
    %v2103 = vsel %vm332, %v2102, %v2101
    %v2104 = vrot.slane %v263, 4
    %v2105 = vsel %vm335, %v2104, %v2103
    %v2106 = vrot.slane %v281, 3
    %v2107 = vsel %vm338, %v2106, %v2105
    %v2108 = vrot.slane %v285, 2
    %v2109 = vsel %vm341, %v2108, %v2107
    %v2110 = vrot.slane %v289, 1
    %v2111 = vsel %vm344, %v2110, %v2109
    %v2112 = vsel %vm347, %v293, %v2111
    %v2113 = vrot.slane %v313, 7
    %v2114 = vrot.slane %v317, 6
    %v2115 = vsel %vm329, %v2114, %v2113
    %v2116 = vrot.slane %v321, 5
    %v2117 = vsel %vm332, %v2116, %v2115
    %v2118 = vrot.slane %v325, 4
    %v2119 = vsel %vm335, %v2118, %v2117
    %2120 = vrot.lane.b32.xlu0 %v2070, 98
    %v2121 = vpop.permute.xlu0 %2120
    %2122 = vrot.lane.b32.xlu0 %v2084, 98
    %v2123 = vpop.permute.xlu0 %2122
    %2124 = vrot.lane.b32.xlu0 %v2098, 98
    %v2125 = vpop.permute.xlu0 %2124
    %2126 = vrot.lane.b32.xlu0 %v2112, 98
    %v2127 = vpop.permute.xlu0 %2126
    %2128 = vrot.lane.b32.xlu0 %v2119, 98
    %v2129 = vpop.permute.xlu0 %2128
    %2135 = vst.msk [vmem:[#allocation2 + $0x10] sm:$0xff] %vm986, %v2121
    %2136 = vst.msk [vmem:[#allocation2 + $0x30] sm:$0xff] %vm986, %v2123
    %2137 = vst.msk [vmem:[#allocation2 + $0x50] sm:$0xff] %vm986, %v2125
    %2138 = vst.msk [vmem:[#allocation2 + $0x70] sm:$0xff] %vm986, %v2127
    %2139 = vst.msk [vmem:[#allocation2 + $0x90] sm:$0xf] %vm991, %v2129
    %v2140 = vrot.slane %v65, 7
    %v2141 = vsel %vm329, %v2140, %v63
    %v2142 = vrot.slane %v67, 6
    %v2143 = vsel %vm332, %v2142, %v2141
    %v2144 = vrot.slane %v69, 5
    %v2145 = vsel %vm335, %v2144, %v2143
    %v2146 = vrot.slane %v105, 4
    %v2147 = vsel %vm338, %v2146, %v2145
    %v2148 = vrot.slane %v109, 3
    %v2149 = vsel %vm341, %v2148, %v2147
    %v2150 = vrot.slane %v113, 2
    %v2151 = vsel %vm344, %v2150, %v2149
    %v2152 = vrot.slane %v117, 1
    %v2153 = vsel %vm347, %v2152, %v2151
    %v2154 = vrot.slane %v141, 7
    %v2155 = vsel %vm329, %v2154, %v137
    %v2156 = vrot.slane %v145, 6
    %v2157 = vsel %vm332, %v2156, %v2155
    %v2158 = vrot.slane %v149, 5
    %v2159 = vsel %vm335, %v2158, %v2157
    %v2160 = vrot.slane %v164, 4
    %v2161 = vsel %vm338, %v2160, %v2159
    %v2162 = vrot.slane %v167, 3
    %v2163 = vsel %vm341, %v2162, %v2161
    %v2164 = vrot.slane %v170, 2
    %v2165 = vsel %vm344, %v2164, %v2163
    %v2166 = vrot.slane %v173, 1
    %v2167 = vsel %vm347, %v2166, %v2165
    %v2168 = vrot.slane %v198, 7
    %v2169 = vsel %vm329, %v2168, %v194
    %v2170 = vrot.slane %v202, 6
    %v2171 = vsel %vm332, %v2170, %v2169
    %v2172 = vrot.slane %v206, 5
    %v2173 = vsel %vm335, %v2172, %v2171
    %v2174 = vrot.slane %v226, 4
    %v2175 = vsel %vm338, %v2174, %v2173
    %v2176 = vrot.slane %v230, 3
    %v2177 = vsel %vm341, %v2176, %v2175
    %v2178 = vrot.slane %v234, 2
    %v2179 = vsel %vm344, %v2178, %v2177
    %v2180 = vrot.slane %v238, 1
    %v2181 = vsel %vm347, %v2180, %v2179
    %v2182 = vrot.slane %v256, 7
    %v2183 = vsel %vm329, %v2182, %v253
    %v2184 = vrot.slane %v259, 6
    %v2185 = vsel %vm332, %v2184, %v2183
    %v2186 = vrot.slane %v262, 5
    %v2187 = vsel %vm335, %v2186, %v2185
    %v2188 = vrot.slane %v283, 4
    %v2189 = vsel %vm338, %v2188, %v2187
    %v2190 = vrot.slane %v287, 3
    %v2191 = vsel %vm341, %v2190, %v2189
    %v2192 = vrot.slane %v291, 2
    %v2193 = vsel %vm344, %v2192, %v2191
    %v2194 = vrot.slane %v295, 1
    %v2195 = vsel %vm347, %v2194, %v2193
    %v2196 = vrot.slane %v319, 7
    %v2197 = vsel %vm329, %v2196, %v315
    %v2198 = vrot.slane %v323, 6
    %v2199 = vsel %vm332, %v2198, %v2197
    %v2200 = vrot.slane %v327, 5
    %v2201 = vsel %vm335, %v2200, %v2199
    %2202 = vrot.lane.b32.xlu0 %v2153, 112
    %v2203 = vpop.permute.xlu0 %2202
    %2204 = vrot.lane.b32.xlu0 %v2167, 112
    %v2205 = vpop.permute.xlu0 %2204
    %2206 = vrot.lane.b32.xlu0 %v2181, 112
    %v2207 = vpop.permute.xlu0 %2206
    %2208 = vrot.lane.b32.xlu0 %v2195, 112
    %v2209 = vpop.permute.xlu0 %2208
    %2210 = vrot.lane.b32.xlu0 %v2201, 112
    %v2211 = vpop.permute.xlu0 %2210
    %2217 = vst.msk [vmem:[#allocation2 + $0x10] sm:$0xff] %vm1070, %v2203
    %2218 = vst.msk [vmem:[#allocation2 + $0x30] sm:$0xff] %vm1070, %v2205
    %2219 = vst.msk [vmem:[#allocation2 + $0x50] sm:$0xff] %vm1070, %v2207
    %2220 = vst.msk [vmem:[#allocation2 + $0x70] sm:$0xff] %vm1070, %v2209
    %2221 = vst.msk [vmem:[#allocation2 + $0x90] sm:$0xf] %vm1075, %v2211
    %v2222 = vsel %vm329, %v65, %v164
    %v2223 = vrot.slane %v67, 7
    %v2224 = vsel %vm332, %v2223, %v2222
    %v2225 = vrot.slane %v69, 6
    %v2226 = vsel %vm335, %v2225, %v2224
    %v2227 = vrot.slane %v105, 5
    %v2228 = vsel %vm338, %v2227, %v2226
    %v2229 = vrot.slane %v109, 4
    %v2230 = vsel %vm341, %v2229, %v2228
    %v2231 = vrot.slane %v113, 3
    %v2232 = vsel %vm344, %v2231, %v2230
    %v2233 = vrot.slane %v117, 2
    %v2234 = vsel %vm347, %v2233, %v2232
    %v2235 = vrot.slane %v137, 1
    %v2236 = vsel %vm329, %v141, %v2235
    %v2237 = vrot.slane %v145, 7
    %v2238 = vsel %vm332, %v2237, %v2236
    %v2239 = vrot.slane %v149, 6
    %v2240 = vsel %vm335, %v2239, %v2238
    %v2241 = vrot.slane %v164, 5
    %v2242 = vsel %vm338, %v2241, %v2240
    %v2243 = vrot.slane %v167, 4
    %v2244 = vsel %vm341, %v2243, %v2242
    %v2245 = vrot.slane %v170, 3
    %v2246 = vsel %vm344, %v2245, %v2244
    %v2247 = vrot.slane %v173, 2
    %v2248 = vsel %vm347, %v2247, %v2246
    %v2249 = vrot.slane %v194, 1
    %v2250 = vsel %vm329, %v198, %v2249
    %v2251 = vrot.slane %v202, 7
    %v2252 = vsel %vm332, %v2251, %v2250
    %v2253 = vrot.slane %v206, 6
    %v2254 = vsel %vm335, %v2253, %v2252
    %v2255 = vrot.slane %v226, 5
    %v2256 = vsel %vm338, %v2255, %v2254
    %v2257 = vrot.slane %v230, 4
    %v2258 = vsel %vm341, %v2257, %v2256
    %v2259 = vrot.slane %v234, 3
    %v2260 = vsel %vm344, %v2259, %v2258
    %v2261 = vrot.slane %v238, 2
    %v2262 = vsel %vm347, %v2261, %v2260
    %v2263 = vrot.slane %v253, 1
    %v2264 = vsel %vm329, %v256, %v2263
    %v2265 = vrot.slane %v259, 7
    %v2266 = vsel %vm332, %v2265, %v2264
    %v2267 = vrot.slane %v262, 6
    %v2268 = vsel %vm335, %v2267, %v2266
    %v2269 = vrot.slane %v283, 5
    %v2270 = vsel %vm338, %v2269, %v2268
    %v2271 = vrot.slane %v287, 4
    %v2272 = vsel %vm341, %v2271, %v2270
    %v2273 = vrot.slane %v291, 3
    %v2274 = vsel %vm344, %v2273, %v2272
    %v2275 = vrot.slane %v295, 2
    %v2276 = vsel %vm347, %v2275, %v2274
    %v2277 = vrot.slane %v315, 1
    %v2278 = vsel %vm329, %v319, %v2277
    %v2279 = vrot.slane %v323, 7
    %v2280 = vsel %vm332, %v2279, %v2278
    %v2281 = vrot.slane %v327, 6
    %v2282 = vsel %vm335, %v2281, %v2280
    %2283 = vrot.lane.b32.xlu0 %v2234, 126
    %v2284 = vpop.permute.xlu0 %2283
    %2285 = vrot.lane.b32.xlu0 %v2248, 126
    %v2286 = vpop.permute.xlu0 %2285
    %2287 = vrot.lane.b32.xlu0 %v2262, 126
    %v2288 = vpop.permute.xlu0 %2287
    %2289 = vrot.lane.b32.xlu0 %v2276, 126
    %v2290 = vpop.permute.xlu0 %2289
    %2291 = vrot.lane.b32.xlu0 %v2282, 126
    %v2292 = vpop.permute.xlu0 %2291
    %2298 = vst.msk [vmem:[#allocation2 + $0x10] sm:$0xff] %vm1153, %v2284
    %2299 = vst.msk [vmem:[#allocation2 + $0x18] sm:$0xff] %vm1155, %v2284
    %2300 = vst.msk [vmem:[#allocation2 + $0x30] sm:$0xff] %vm1153, %v2286
    %2301 = vst.msk [vmem:[#allocation2 + $0x38] sm:$0xff] %vm1155, %v2286
    %2302 = vst.msk [vmem:[#allocation2 + $0x50] sm:$0xff] %vm1153, %v2288
    %2303 = vst.msk [vmem:[#allocation2 + $0x58] sm:$0xff] %vm1155, %v2288
    %2304 = vst.msk [vmem:[#allocation2 + $0x70] sm:$0xff] %vm1153, %v2290
    %2305 = vst.msk [vmem:[#allocation2 + $0x78] sm:$0xff] %vm1155, %v2290
    %2306 = vst.msk [vmem:[#allocation2 + $0x90] sm:$0xf] %vm1163, %v2292
    %2307 = vst.msk [vmem:[#allocation2 + $0x98] sm:$0xf] %vm1165, %v2292
    %v2308 = vsel %vm329, %v167, %v253
    %v2309 = vsel %vm332, %v67, %v2308
    %v2310 = vrot.slane %v69, 7
    %v2311 = vsel %vm335, %v2310, %v2309
    %v2312 = vrot.slane %v105, 6
    %v2313 = vsel %vm338, %v2312, %v2311
    %v2314 = vrot.slane %v109, 5
    %v2315 = vsel %vm341, %v2314, %v2313
    %v2316 = vrot.slane %v113, 4
    %v2317 = vsel %vm344, %v2316, %v2315
    %v2318 = vrot.slane %v117, 3
    %v2319 = vsel %vm347, %v2318, %v2317
    %v2320 = vrot.slane %v137, 2
    %v2321 = vrot.slane %v141, 1
    %v2322 = vsel %vm329, %v2321, %v2320
    %v2323 = vsel %vm332, %v145, %v2322
    %v2324 = vrot.slane %v149, 7
    %v2325 = vsel %vm335, %v2324, %v2323
    %v2326 = vrot.slane %v164, 6
    %v2327 = vsel %vm338, %v2326, %v2325
    %v2328 = vrot.slane %v167, 5
    %v2329 = vsel %vm341, %v2328, %v2327
    %v2330 = vrot.slane %v170, 4
    %v2331 = vsel %vm344, %v2330, %v2329
    %v2332 = vrot.slane %v173, 3
    %v2333 = vsel %vm347, %v2332, %v2331
    %v2334 = vrot.slane %v194, 2
    %v2335 = vrot.slane %v198, 1
    %v2336 = vsel %vm329, %v2335, %v2334
    %v2337 = vsel %vm332, %v202, %v2336
    %v2338 = vrot.slane %v206, 7
    %v2339 = vsel %vm335, %v2338, %v2337
    %v2340 = vrot.slane %v226, 6
    %v2341 = vsel %vm338, %v2340, %v2339
    %v2342 = vrot.slane %v230, 5
    %v2343 = vsel %vm341, %v2342, %v2341
    %v2344 = vrot.slane %v234, 4
    %v2345 = vsel %vm344, %v2344, %v2343
    %v2346 = vrot.slane %v238, 3
    %v2347 = vsel %vm347, %v2346, %v2345
    %v2348 = vrot.slane %v253, 2
    %v2349 = vrot.slane %v256, 1
    %v2350 = vsel %vm329, %v2349, %v2348
    %v2351 = vsel %vm332, %v259, %v2350
    %v2352 = vrot.slane %v262, 7
    %v2353 = vsel %vm335, %v2352, %v2351
    %v2354 = vrot.slane %v283, 6
    %v2355 = vsel %vm338, %v2354, %v2353
    %v2356 = vrot.slane %v287, 5
    %v2357 = vsel %vm341, %v2356, %v2355
    %v2358 = vrot.slane %v291, 4
    %v2359 = vsel %vm344, %v2358, %v2357
    %v2360 = vrot.slane %v295, 3
    %v2361 = vsel %vm347, %v2360, %v2359
    %v2362 = vrot.slane %v315, 2
    %v2363 = vrot.slane %v319, 1
    %v2364 = vsel %vm329, %v2363, %v2362
    %v2365 = vsel %vm332, %v323, %v2364
    %v2366 = vrot.slane %v327, 7
    %v2367 = vsel %vm335, %v2366, %v2365
    %2368 = vrot.lane.b32.xlu0 %v2319, 12
    %v2369 = vpop.permute.xlu0 %2368
    %2370 = vrot.lane.b32.xlu0 %v2333, 12
    %v2371 = vpop.permute.xlu0 %2370
    %2372 = vrot.lane.b32.xlu0 %v2347, 12
    %v2373 = vpop.permute.xlu0 %2372
    %2374 = vrot.lane.b32.xlu0 %v2361, 12
    %v2375 = vpop.permute.xlu0 %2374
    %2376 = vrot.lane.b32.xlu0 %v2367, 12
    %v2377 = vpop.permute.xlu0 %2376
    %2383 = vst.msk [vmem:[#allocation2 + $0x18] sm:$0xff] %vm1242, %v2369
    %2384 = vst.msk [vmem:[#allocation2 + $0x38] sm:$0xff] %vm1242, %v2371
    %2385 = vst.msk [vmem:[#allocation2 + $0x58] sm:$0xff] %vm1242, %v2373
    %2386 = vst.msk [vmem:[#allocation2 + $0x78] sm:$0xff] %vm1242, %v2375
    %2387 = vst.msk [vmem:[#allocation2 + $0x98] sm:$0xf] %vm1247, %v2377
    %v2388 = vrot.slane %v63, 3
    %v2389 = vsel %vm329, %v256, %v2388
    %v2390 = vsel %vm332, %v170, %v2389
    %v2391 = vsel %vm335, %v69, %v2390
    %v2392 = vrot.slane %v105, 7
    %v2393 = vsel %vm338, %v2392, %v2391
    %v2394 = vrot.slane %v109, 6
    %v2395 = vsel %vm341, %v2394, %v2393
    %v2396 = vrot.slane %v113, 5
    %v2397 = vsel %vm344, %v2396, %v2395
    %v2398 = vrot.slane %v117, 4
    %v2399 = vsel %vm347, %v2398, %v2397
    %v2400 = vrot.slane %v137, 3
    %v2401 = vrot.slane %v141, 2
    %v2402 = vsel %vm329, %v2401, %v2400
    %v2403 = vrot.slane %v145, 1
    %v2404 = vsel %vm332, %v2403, %v2402
    %v2405 = vsel %vm335, %v149, %v2404
    %v2406 = vrot.slane %v164, 7
    %v2407 = vsel %vm338, %v2406, %v2405
    %v2408 = vrot.slane %v167, 6
    %v2409 = vsel %vm341, %v2408, %v2407
    %v2410 = vrot.slane %v170, 5
    %v2411 = vsel %vm344, %v2410, %v2409
    %v2412 = vrot.slane %v173, 4
    %v2413 = vsel %vm347, %v2412, %v2411
    %v2414 = vrot.slane %v194, 3
    %v2415 = vrot.slane %v198, 2
    %v2416 = vsel %vm329, %v2415, %v2414
    %v2417 = vrot.slane %v202, 1
    %v2418 = vsel %vm332, %v2417, %v2416
    %v2419 = vsel %vm335, %v206, %v2418
    %v2420 = vrot.slane %v226, 7
    %v2421 = vsel %vm338, %v2420, %v2419
    %v2422 = vrot.slane %v230, 6
    %v2423 = vsel %vm341, %v2422, %v2421
    %v2424 = vrot.slane %v234, 5
    %v2425 = vsel %vm344, %v2424, %v2423
    %v2426 = vrot.slane %v238, 4
    %v2427 = vsel %vm347, %v2426, %v2425
    %v2428 = vrot.slane %v253, 3
    %v2429 = vrot.slane %v256, 2
    %v2430 = vsel %vm329, %v2429, %v2428
    %v2431 = vrot.slane %v259, 1
    %v2432 = vsel %vm332, %v2431, %v2430
    %v2433 = vsel %vm335, %v262, %v2432
    %v2434 = vrot.slane %v283, 7
    %v2435 = vsel %vm338, %v2434, %v2433
    %v2436 = vrot.slane %v287, 6
    %v2437 = vsel %vm341, %v2436, %v2435
    %v2438 = vrot.slane %v291, 5
    %v2439 = vsel %vm344, %v2438, %v2437
    %v2440 = vrot.slane %v295, 4
    %v2441 = vsel %vm347, %v2440, %v2439
    %v2442 = vrot.slane %v315, 3
    %v2443 = vrot.slane %v319, 2
    %v2444 = vsel %vm329, %v2443, %v2442
    %v2445 = vrot.slane %v323, 1
    %v2446 = vsel %vm332, %v2445, %v2444
    %v2447 = vsel %vm335, %v327, %v2446
    %2448 = vrot.lane.b32.xlu0 %v2399, 26
    %v2449 = vpop.permute.xlu0 %2448
    %2450 = vrot.lane.b32.xlu0 %v2413, 26
    %v2451 = vpop.permute.xlu0 %2450
    %2452 = vrot.lane.b32.xlu0 %v2427, 26
    %v2453 = vpop.permute.xlu0 %2452
    %2454 = vrot.lane.b32.xlu0 %v2441, 26
    %v2455 = vpop.permute.xlu0 %2454
    %2456 = vrot.lane.b32.xlu0 %v2447, 26
    %v2457 = vpop.permute.xlu0 %2456
    %2463 = vst.msk [vmem:[#allocation2 + $0x18] sm:$0xff] %vm1324, %v2449
    %2464 = vst.msk [vmem:[#allocation2 + $0x38] sm:$0xff] %vm1324, %v2451
    %2465 = vst.msk [vmem:[#allocation2 + $0x58] sm:$0xff] %vm1324, %v2453
    %2466 = vst.msk [vmem:[#allocation2 + $0x78] sm:$0xff] %vm1324, %v2455
    %2467 = vst.msk [vmem:[#allocation2 + $0x98] sm:$0xf] %vm1329, %v2457
    %v2468 = vrot.slane %v63, 4
    %v2469 = vrot.slane %v65, 3
    %v2470 = vsel %vm329, %v2469, %v2468
    %v2471 = vsel %vm332, %v259, %v2470
    %v2472 = vsel %vm335, %v173, %v2471
    %v2473 = vsel %vm338, %v105, %v2472
    %v2474 = vrot.slane %v109, 7
    %v2475 = vsel %vm341, %v2474, %v2473
    %v2476 = vrot.slane %v113, 6
    %v2477 = vsel %vm344, %v2476, %v2475
    %v2478 = vrot.slane %v117, 5
    %v2479 = vsel %vm347, %v2478, %v2477
    %v2480 = vrot.slane %v137, 4
    %v2481 = vrot.slane %v141, 3
    %v2482 = vsel %vm329, %v2481, %v2480
    %v2483 = vrot.slane %v145, 2
    %v2484 = vsel %vm332, %v2483, %v2482
    %v2485 = vrot.slane %v149, 1
    %v2486 = vsel %vm335, %v2485, %v2484
    %v2487 = vsel %vm338, %v164, %v2486
    %v2488 = vrot.slane %v167, 7
    %v2489 = vsel %vm341, %v2488, %v2487
    %v2490 = vrot.slane %v170, 6
    %v2491 = vsel %vm344, %v2490, %v2489
    %v2492 = vrot.slane %v173, 5
    %v2493 = vsel %vm347, %v2492, %v2491
    %v2494 = vrot.slane %v194, 4
    %v2495 = vrot.slane %v198, 3
    %v2496 = vsel %vm329, %v2495, %v2494
    %v2497 = vrot.slane %v202, 2
    %v2498 = vsel %vm332, %v2497, %v2496
    %v2499 = vrot.slane %v206, 1
    %v2500 = vsel %vm335, %v2499, %v2498
    %v2501 = vsel %vm338, %v226, %v2500
    %v2502 = vrot.slane %v230, 7
    %v2503 = vsel %vm341, %v2502, %v2501
    %v2504 = vrot.slane %v234, 6
    %v2505 = vsel %vm344, %v2504, %v2503
    %v2506 = vrot.slane %v238, 5
    %v2507 = vsel %vm347, %v2506, %v2505
    %v2508 = vrot.slane %v253, 4
    %v2509 = vrot.slane %v256, 3
    %v2510 = vsel %vm329, %v2509, %v2508
    %v2511 = vrot.slane %v259, 2
    %v2512 = vsel %vm332, %v2511, %v2510
    %v2513 = vrot.slane %v262, 1
    %v2514 = vsel %vm335, %v2513, %v2512
    %v2515 = vsel %vm338, %v283, %v2514
    %v2516 = vrot.slane %v287, 7
    %v2517 = vsel %vm341, %v2516, %v2515
    %v2518 = vrot.slane %v291, 6
    %v2519 = vsel %vm344, %v2518, %v2517
    %v2520 = vrot.slane %v295, 5
    %v2521 = vsel %vm347, %v2520, %v2519
    %v2522 = vrot.slane %v315, 4
    %v2523 = vrot.slane %v319, 3
    %v2524 = vsel %vm329, %v2523, %v2522
    %v2525 = vrot.slane %v323, 2
    %v2526 = vsel %vm332, %v2525, %v2524
    %v2527 = vrot.slane %v327, 1
    %v2528 = vsel %vm335, %v2527, %v2526
    %2529 = vrot.lane.b32.xlu0 %v2479, 40
    %v2530 = vpop.permute.xlu0 %2529
    %2531 = vrot.lane.b32.xlu0 %v2493, 40
    %v2532 = vpop.permute.xlu0 %2531
    %2533 = vrot.lane.b32.xlu0 %v2507, 40
    %v2534 = vpop.permute.xlu0 %2533
    %2535 = vrot.lane.b32.xlu0 %v2521, 40
    %v2536 = vpop.permute.xlu0 %2535
    %2537 = vrot.lane.b32.xlu0 %v2528, 40
    %v2538 = vpop.permute.xlu0 %2537
    %2544 = vst.msk [vmem:[#allocation2 + $0x18] sm:$0xff] %vm1407, %v2530
    %2545 = vst.msk [vmem:[#allocation2 + $0x38] sm:$0xff] %vm1407, %v2532
    %2546 = vst.msk [vmem:[#allocation2 + $0x58] sm:$0xff] %vm1407, %v2534
    %2547 = vst.msk [vmem:[#allocation2 + $0x78] sm:$0xff] %vm1407, %v2536
    %2548 = vst.msk [vmem:[#allocation2 + $0x98] sm:$0xf] %vm1412, %v2538
    %v2549 = vrot.slane %v63, 5
    %v2550 = vrot.slane %v65, 4
    %v2551 = vsel %vm329, %v2550, %v2549
    %v2552 = vrot.slane %v67, 3
    %v2553 = vsel %vm332, %v2552, %v2551
    %v2554 = vsel %vm335, %v262, %v2553
    %v2555 = vrot.slane %v105, 1
    %v2556 = vsel %vm338, %v2555, %v2554
    %v2557 = vsel %vm341, %v109, %v2556
    %v2558 = vrot.slane %v113, 7
    %v2559 = vsel %vm344, %v2558, %v2557
    %v2560 = vrot.slane %v117, 6
    %v2561 = vsel %vm347, %v2560, %v2559
    %v2562 = vrot.slane %v137, 5
    %v2563 = vrot.slane %v141, 4
    %v2564 = vsel %vm329, %v2563, %v2562
    %v2565 = vrot.slane %v145, 3
    %v2566 = vsel %vm332, %v2565, %v2564
    %v2567 = vrot.slane %v149, 2
    %v2568 = vsel %vm335, %v2567, %v2566
    %v2569 = vrot.slane %v164, 1
    %v2570 = vsel %vm338, %v2569, %v2568
    %v2571 = vsel %vm341, %v167, %v2570
    %v2572 = vrot.slane %v170, 7
    %v2573 = vsel %vm344, %v2572, %v2571
    %v2574 = vrot.slane %v173, 6
    %v2575 = vsel %vm347, %v2574, %v2573
    %v2576 = vrot.slane %v194, 5
    %v2577 = vrot.slane %v198, 4
    %v2578 = vsel %vm329, %v2577, %v2576
    %v2579 = vrot.slane %v202, 3
    %v2580 = vsel %vm332, %v2579, %v2578
    %v2581 = vrot.slane %v206, 2
    %v2582 = vsel %vm335, %v2581, %v2580
    %v2583 = vrot.slane %v226, 1
    %v2584 = vsel %vm338, %v2583, %v2582
    %v2585 = vsel %vm341, %v230, %v2584
    %v2586 = vrot.slane %v234, 7
    %v2587 = vsel %vm344, %v2586, %v2585
    %v2588 = vrot.slane %v238, 6
    %v2589 = vsel %vm347, %v2588, %v2587
    %v2590 = vrot.slane %v253, 5
    %v2591 = vrot.slane %v256, 4
    %v2592 = vsel %vm329, %v2591, %v2590
    %v2593 = vrot.slane %v259, 3
    %v2594 = vsel %vm332, %v2593, %v2592
    %v2595 = vrot.slane %v262, 2
    %v2596 = vsel %vm335, %v2595, %v2594
    %v2597 = vrot.slane %v283, 1
    %v2598 = vsel %vm338, %v2597, %v2596
    %v2599 = vsel %vm341, %v287, %v2598
    %v2600 = vrot.slane %v291, 7
    %v2601 = vsel %vm344, %v2600, %v2599
    %v2602 = vrot.slane %v295, 6
    %v2603 = vsel %vm347, %v2602, %v2601
    %v2604 = vrot.slane %v315, 5
    %v2605 = vrot.slane %v319, 4
    %v2606 = vsel %vm329, %v2605, %v2604
    %v2607 = vrot.slane %v323, 3
    %v2608 = vsel %vm332, %v2607, %v2606
    %v2609 = vrot.slane %v327, 2
    %v2610 = vsel %vm335, %v2609, %v2608
    %2611 = vrot.lane.b32.xlu0 %v2561, 54
    %v2612 = vpop.permute.xlu0 %2611
    %2613 = vrot.lane.b32.xlu0 %v2575, 54
    %v2614 = vpop.permute.xlu0 %2613
    %2615 = vrot.lane.b32.xlu0 %v2589, 54
    %v2616 = vpop.permute.xlu0 %2615
    %2617 = vrot.lane.b32.xlu0 %v2603, 54
    %v2618 = vpop.permute.xlu0 %2617
    %2619 = vrot.lane.b32.xlu0 %v2610, 54
    %v2620 = vpop.permute.xlu0 %2619
    %2626 = vst.msk [vmem:[#allocation2 + $0x18] sm:$0xff] %vm1491, %v2612
    %2627 = vst.msk [vmem:[#allocation2 + $0x38] sm:$0xff] %vm1491, %v2614
    %2628 = vst.msk [vmem:[#allocation2 + $0x58] sm:$0xff] %vm1491, %v2616
    %2629 = vst.msk [vmem:[#allocation2 + $0x78] sm:$0xff] %vm1491, %v2618
    %2630 = vst.msk [vmem:[#allocation2 + $0x98] sm:$0xf] %vm1496, %v2620
    %v2631 = vld [vmem:[#allocation6] sm:$0xff]
    %v2632 = vld [vmem:[#allocation2] sm:$0xff]
    %v2633 = vld [vmem:[#allocation2 + $0x8] sm:$0xff]
    %v2634 = vld [vmem:[#allocation2 + $0x10] sm:$0xff]
    %v2635 = vld [vmem:[#allocation2 + $0x18] sm:$0xff]
    %v2636 = vld [vmem:[#allocation2 + $0x20] sm:$0xff]
    %v2637 = vld [vmem:[#allocation2 + $0x28] sm:$0xff]
    %v2638 = vld [vmem:[#allocation2 + $0x30] sm:$0xff]
    %v2639 = vld [vmem:[#allocation2 + $0x38] sm:$0xff]
    %v2640 = vld [vmem:[#allocation2 + $0x40] sm:$0xff]
    %v2641 = vld [vmem:[#allocation2 + $0x48] sm:$0xff]
    %v2642 = vld [vmem:[#allocation2 + $0x50] sm:$0xff]
    %v2643 = vld [vmem:[#allocation2 + $0x58] sm:$0xff]
    %v2644 = vld [vmem:[#allocation2 + $0x60] sm:$0xff]
    %v2645 = vld [vmem:[#allocation2 + $0x68] sm:$0xff]
    %v2646 = vld [vmem:[#allocation2 + $0x70] sm:$0xff]
    %v2647 = vld [vmem:[#allocation2 + $0x78] sm:$0xff]
    %v2648 = vld [vmem:[#allocation2 + $0x80] sm:$0xf]
    %v2649 = vld [vmem:[#allocation2 + $0x88] sm:$0xf]
    %v2650 = vld [vmem:[#allocation2 + $0x90] sm:$0xf]
    %v2651 = vld [vmem:[#allocation2 + $0x98] sm:$0xf]
    %vm2652 = vcmask 293888
    %v2654 = vsel %vm2652, %v2631, 0
    %vm2656 = vcmask 1043456
    %v2658 = vsel %vm2656, %v2648, 0
    %v2661 = vsel %vm2656, %v2649, 0
    %v2664 = vsel %vm2656, %v2650, 0
    %v2667 = vsel %vm2656, %v2651, 0
    %2669 = vmatpush.msra.mxu0 0.0
    %2670 = vmatpush.msra.mxu0 0.0
    %2671 = vmatpush.msra.mxu0 0.0
    %2672 = vmatpush.msra.mxu0 0.0
    %2673 = vmatpush.msra.mxu0 0.0
    %2674 = vmatpush.msra.mxu0 0.0
    %2675 = vmatpush.msra.mxu0 0.0
    %2676 = vmatpush.msra.mxu0 0.0
    %2677 = vmatpush.msra.mxu0 0.0
    %2678 = vmatpush.msra.mxu0 0.0
    %2679 = vmatpush.msra.mxu0 0.0
    %2680 = vmatpush.msra.mxu0 %v2658
    %2681 = vmatpush.msra.mxu0 %v2644
    %2682 = vmatpush.msra.mxu0 %v2640
    %2683 = vmatpush.msra.mxu0 %v2636
    %2684 = vmatpush.msra.mxu0 %v2632
    %2685 = vmatmul.f32.gmra.mxu0 %v2654
    %v2686 = vpop.f32.mrf.mxu0
    %v2687 = vadd.f32 0.0, %v2686
    %2688 = vdwg.mxu0
    %2689 = vmatpush.msra.mxu0 0.0
    %2690 = vmatpush.msra.mxu0 0.0
    %2691 = vmatpush.msra.mxu0 0.0
    %2692 = vmatpush.msra.mxu0 0.0
    %2693 = vmatpush.msra.mxu0 0.0
    %2694 = vmatpush.msra.mxu0 0.0
    %2695 = vmatpush.msra.mxu0 0.0
    %2696 = vmatpush.msra.mxu0 0.0
    %2697 = vmatpush.msra.mxu0 0.0
    %2698 = vmatpush.msra.mxu0 0.0
    %2699 = vmatpush.msra.mxu0 0.0
    %2700 = vmatpush.msra.mxu0 %v2661
    %2701 = vmatpush.msra.mxu0 %v2645
    %2702 = vmatpush.msra.mxu0 %v2641
    %2703 = vmatpush.msra.mxu0 %v2637
    %2704 = vmatpush.msra.mxu0 %v2633
    %2705 = vmatmul.f32.gmra.mxu0 %v2654
    %v2706 = vpop.f32.mrf.mxu0
    %v2707 = vadd.f32 0.0, %v2706
    %2708 = vdwg.mxu0
    %2709 = vmatpush.msra.mxu0 0.0
    %2710 = vmatpush.msra.mxu0 0.0
    %2711 = vmatpush.msra.mxu0 0.0
    %2712 = vmatpush.msra.mxu0 0.0
    %2713 = vmatpush.msra.mxu0 0.0
    %2714 = vmatpush.msra.mxu0 0.0
    %2715 = vmatpush.msra.mxu0 0.0
    %2716 = vmatpush.msra.mxu0 0.0
    %2717 = vmatpush.msra.mxu0 0.0
    %2718 = vmatpush.msra.mxu0 0.0
    %2719 = vmatpush.msra.mxu0 0.0
    %2720 = vmatpush.msra.mxu0 %v2664
    %2721 = vmatpush.msra.mxu0 %v2646
    %2722 = vmatpush.msra.mxu0 %v2642
    %2723 = vmatpush.msra.mxu0 %v2638
    %2724 = vmatpush.msra.mxu0 %v2634
    %2725 = vmatmul.f32.gmra.mxu0 %v2654
    %v2726 = vpop.f32.mrf.mxu0
    %v2727 = vadd.f32 0.0, %v2726
    %2728 = vdwg.mxu0
    %2729 = vmatpush.msra.mxu0 0.0
    %2730 = vmatpush.msra.mxu0 0.0
    %2731 = vmatpush.msra.mxu0 0.0
    %2732 = vmatpush.msra.mxu0 0.0
    %2733 = vmatpush.msra.mxu0 0.0
    %2734 = vmatpush.msra.mxu0 0.0
    %2735 = vmatpush.msra.mxu0 0.0
    %2736 = vmatpush.msra.mxu0 0.0
    %2737 = vmatpush.msra.mxu0 0.0
    %2738 = vmatpush.msra.mxu0 0.0
    %2739 = vmatpush.msra.mxu0 0.0
    %2740 = vmatpush.msra.mxu0 %v2667
    %2741 = vmatpush.msra.mxu0 %v2647
    %2742 = vmatpush.msra.mxu0 %v2643
    %2743 = vmatpush.msra.mxu0 %v2639
    %2744 = vmatpush.msra.mxu0 %v2635
    %2745 = vmatmul.f32.gmra.mxu0 %v2654
    %v2746 = vpop.f32.mrf.mxu0
    %v2747 = vadd.f32 0.0, %v2746
    %2748 = vdwg.mxu0
    %2749 = vst [vmem:[#allocation8] sm:$0xff] %v2687
    %vm2750 = vcmask 556032
    %2751 = vst.msk [vmem:[#allocation8 + $0x8] sm:$0xff] %vm2750, %v2707
    %s2752 = scalar_lea.vmem [#allocation8], 16
    %2753 = vst [vmem:[%s2752] sm:$0xff] %v2727
    %2754 = vst.msk [vmem:[%s2752 + $0x8] sm:$0xff] %vm2750, %v2747
    // Predicated region
    $region18: #{tpu_custom_call.1} parent=1 // pred_check
      _
    $region19: #{tpu_custom_call.1} parent=1 // pred_check_branch
      %2756 = sbr.rel (0) target = $region21
    $region20: #{tpu_custom_call.1} parent=1 // pred_region
      %2758 = vsyncadd [#allocation5], 0
      %s2759 = sshll.u32 [#allocation8], 4
      %s2760 = int_to_ptr.vmem [resolvable:$true] %s2759
      %s2761 = sshll.u32 %s2, 4
      %s2762 = int_to_ptr.hbm [resolvable:$true] %s2761
      %2767 = dma.vmem_to_hbm [thread:$0]  %s2760, 512, %s2762, [#allocation5], 256, 256, 16
    $region21: #{tpu_custom_call.1} parent=1 // pred_fallthru
      _
    // Predicated region
    $region22: #{tpu_custom_call.1} parent=1 // pred_check
      _
    $region23: #{tpu_custom_call.1} parent=1 // pred_check_branch
      %2769 = sbr.rel (0) target = $region25
    $region24: #{tpu_custom_call.1} parent=1 // pred_region
      %2771 = dma.done [#allocation5], 512
    $region25: #{tpu_custom_call.1} parent=1 // pred_fallthru
      _
    %2772 = vsyncpa [#allocation4], 1
    %2773 = vsyncpa [#allocation7], 1
    %2774 = vsyncpa [#allocation5], 1

</llo_original>
